<compile_context>
chip_gen: v7x
topology: tpu7x:2x2x1
jax: 0.10.0
libtpu: 0.0.40
codegen_flags: <defaults>
</compile_context>

<pallas_src>
import functools

import jax
import jax.numpy as jnp
from jax import lax
from jax.experimental import pallas as pl
from jax.experimental.pallas import tpu as pltpu


def _layer_norm(v, g, b, eps=1e-5):
    mu = jnp.mean(v, axis=-1, keepdims=True)
    var = jnp.mean((v - mu) ** 2, axis=-1, keepdims=True)
    return (v - mu) * lax.rsqrt(var + eps) * g + b


def _erf_approx(v):
    # Abramowitz & Stegun 7.1.26 rational approximation, |err| <= 1.5e-7.
    # Uses only mul/add/exp/select, all of which lower cleanly in Mosaic.
    p = jnp.float32(0.3275911)
    a1 = jnp.float32(0.254829592)
    a2 = jnp.float32(-0.284496736)
    a3 = jnp.float32(1.421413741)
    a4 = jnp.float32(-1.453152027)
    a5 = jnp.float32(1.061405429)
    av = jnp.abs(v)
    t = pl.reciprocal(1.0 + p * av, approx=False)
    poly = ((((a5 * t + a4) * t + a3) * t + a2) * t + a1) * t
    y = 1.0 - poly * jnp.exp(-av * av)
    return jnp.where(v >= 0, y, -y)


def _gelu_exact_kernel(v):
    # Exact erf-based GELU (PyTorch nn.GELU() default), erf via approximation.
    return 0.5 * v * (1.0 + _erf_approx(v * jnp.float32(0.7071067811865476)))


def _gelu_exact_ref(v):
    return 0.5 * v * (1.0 + lax.erf(v * jnp.float32(0.7071067811865476)))


def vit_layer_kernel(x_ref,
                     ln1g_ref, ln1b_ref,
                     wq_ref, bq_ref, wk_ref, bk_ref, wv_ref, bv_ref,
                     wo_ref, bo_ref,
                     ln2g_ref, ln2b_ref,
                     w1_ref, b1_ref, w2_ref, b2_ref,
                     o_ref,
                     ctx_ref,               # VMEM scratch: (block_b*S, E) f32
                     *, num_head):
    Bt, S, E = x_ref.shape
    dh = E // num_head
    scale = jnp.float32(1.0 / (dh ** 0.5))

    # Flatten the image block so every big matmul has M = Bt*S rows.
    x = x_ref[...].astype(jnp.float32).reshape(Bt * S, E)          # (M, E) f32

    # ----- pre-LN 1 (f32) -----
    nx = _layer_norm(x, ln1g_ref[...], ln1b_ref[...])
    nx_bf = nx.astype(jnp.bfloat16)

    # ----- QKV projections: bf16 operands, f32 accumulation -----
    q = jnp.dot(nx_bf, wq_ref[...], preferred_element_type=jnp.float32) + bq_ref[...]
    k = jnp.dot(nx_bf, wk_ref[...], preferred_element_type=jnp.float32) + bk_ref[...]
    v = jnp.dot(nx_bf, wv_ref[...], preferred_element_type=jnp.float32) + bv_ref[...]

    # ----- multi-head self attention (static loop over images / heads) -----
    for b in range(Bt):                       # static; block_b is small
        r0 = b * S
        for h in range(num_head):             # static unroll over heads
            c0 = h * dh
            # scale folded into q before the bf16 cast (== scaling the scores)
            qh = (q[r0:r0 + S, c0:c0 + dh] * scale).astype(jnp.bfloat16)   # (S, dh)
            kh = k[r0:r0 + S, c0:c0 + dh].astype(jnp.bfloat16)             # (S, dh)
            vh = v[r0:r0 + S, c0:c0 + dh].astype(jnp.bfloat16)             # (S, dh)

            # Contract over dh of both operands -- no materialized kh.T.
            scores = lax.dot_general(
                qh, kh, (((1,), (1,)), ((), ())),
                preferred_element_type=jnp.float32)                         # (S, S) f32

            scores = scores - jnp.max(scores, axis=-1, keepdims=True)
            p = jnp.exp(scores)
            p = p * pl.reciprocal(jnp.sum(p, axis=-1, keepdims=True), approx=True)

            ctx = jnp.dot(p.astype(jnp.bfloat16), vh,
                          preferred_element_type=jnp.float32)               # (S, dh)
            ctx_ref[r0:r0 + S, c0:c0 + dh] = ctx                            # static slice store

    # ----- output projection + residual -----
    attn = jnp.dot(ctx_ref[...].astype(jnp.bfloat16), wo_ref[...],
                   preferred_element_type=jnp.float32) + bo_ref[...]
    x1 = attn + x

    # ----- pre-LN 2 + FFN + residual -----
    nx2 = _layer_norm(x1, ln2g_ref[...], ln2b_ref[...])
    h1 = jnp.dot(nx2.astype(jnp.bfloat16), w1_ref[...],
                 preferred_element_type=jnp.float32) + b1_ref[...]
    h1 = _gelu_exact_kernel(h1)
    h2 = jnp.dot(h1.astype(jnp.bfloat16), w2_ref[...],
                 preferred_element_type=jnp.float32) + b2_ref[...]
    y = h2 + x1

    o_ref[...] = y.reshape(Bt, S, E).astype(o_ref.dtype)


def vit_layer(x, params, num_head, *, block_b=1):
    B, S, E = x.shape
    F = params["w1"].shape[1]
    assert E % num_head == 0, "emb_dim must be divisible by num_head"
    assert B % block_b == 0, "batch must be divisible by block_b"

    def full2d(shape):
        return pl.BlockSpec(shape, lambda b: (0, 0))

    in_specs = [
        pl.BlockSpec((block_b, S, E), lambda b: (b, 0, 0)),   # x
        full2d((1, E)), full2d((1, E)),                       # ln1 gamma/beta (f32)
        full2d((E, E)), full2d((1, E)),                       # wq (bf16), bq (f32)
        full2d((E, E)), full2d((1, E)),                       # wk, bk
        full2d((E, E)), full2d((1, E)),                       # wv, bv
        full2d((E, E)), full2d((1, E)),                       # wo, bo
        full2d((1, E)), full2d((1, E)),                       # ln2 gamma/beta
        full2d((E, F)), full2d((1, F)),                       # ffn w1 (bf16), b1
        full2d((F, E)), full2d((1, E)),                       # ffn w2 (bf16), b2
    ]

    kernel = functools.partial(vit_layer_kernel, num_head=num_head)

    # Advisory cost estimate so XLA can schedule surrounding ops around this call.
    flops = 2 * B * S * (4 * E * E + 2 * E * F + 2 * S * E)
    transcendentals = B * num_head * S * S + B * S * F
    bytes_accessed = int(
        x.size * x.dtype.itemsize
        + sum(int(v.size) * v.dtype.itemsize for v in params.values())
        + x.size * x.dtype.itemsize)

    return pl.pallas_call(
        kernel,
        out_shape=jax.ShapeDtypeStruct((B, S, E), x.dtype),
        grid_spec=pltpu.PrefetchScalarGridSpec(
            num_scalar_prefetch=0,
            grid=(B // block_b,),
            in_specs=in_specs,
            out_specs=pl.BlockSpec((block_b, S, E), lambda b: (b, 0, 0)),
            scratch_shapes=[pltpu.VMEM((block_b * S, E), jnp.float32)],
        ),
        compiler_params=pltpu.CompilerParams(
            dimension_semantics=("parallel",),
            vmem_limit_bytes=32 * 1024 * 1024,
        ),
        cost_estimate=pl.CostEstimate(
            flops=flops,
            transcendentals=transcendentals,
            bytes_accessed=bytes_accessed),
    )(
        x,
        params["ln1_g"], params["ln1_b"],
        params["wq"], params["bq"], params["wk"], params["bk"],
        params["wv"], params["bv"], params["wo"], params["bo"],
        params["ln2_g"], params["ln2_b"],
        params["w1"], params["b1"], params["w2"], params["b2"],
    )


def vit_layer_ref(x, params, num_head):
    """Pure-JAX f32 reference (same weights, f32 math, exact erf GELU)."""
    B, S, E = x.shape
    dh = E // num_head
    f32 = jnp.float32
    xf = x.astype(f32)
    wq, wk, wv, wo = (params[n].astype(f32) for n in ("wq", "wk", "wv", "wo"))
    w1, w2 = params["w1"].astype(f32), params["w2"].astype(f32)

    nx = _layer_norm(xf, params["ln1_g"], params["ln1_b"])
    q = nx @ wq + params["bq"]
    k = nx @ wk + params["bk"]
    v = nx @ wv + params["bv"]
    q = q.reshape(B, S, num_head, dh).transpose(0, 2, 1, 3)
    k = k.reshape(B, S, num_head, dh).transpose(0, 2, 1, 3)
    v = v.reshape(B, S, num_head, dh).transpose(0, 2, 1, 3)
    scores = jnp.einsum("bhqd,bhkd->bhqk", q, k) / jnp.sqrt(jnp.float32(dh))
    p = jax.nn.softmax(scores, axis=-1)
    attn = jnp.einsum("bhqk,bhkd->bhqd", p, v).transpose(0, 2, 1, 3).reshape(B, S, E)
    attn = attn @ wo + params["bo"]
    x1 = attn + xf

    nx2 = _layer_norm(x1, params["ln2_g"], params["ln2_b"])
    h1 = _gelu_exact_ref(nx2 @ w1 + params["b1"])
    h2 = h1 @ w2 + params["b2"]
    return (h2 + x1).astype(x.dtype)


def init_params(key, emb_dim, ffn_dim):
    ks = jax.random.split(key, 12)
    s = 0.02

    def w(k, shape):   # matmul weights stored in bf16 (halves HBM->VMEM DMA)
        return (s * jax.random.normal(k, shape, jnp.float32)).astype(jnp.bfloat16)

    def b(k, shape):   # biases / LN params stay f32 (tiny)
        return s * jax.random.normal(k, shape, jnp.float32)

    return {
        "ln1_g": jnp.ones((1, emb_dim), jnp.float32),
        "ln1_b": jnp.zeros((1, emb_dim), jnp.float32),
        "ln2_g": jnp.ones((1, emb_dim), jnp.float32),
        "ln2_b": jnp.zeros((1, emb_dim), jnp.float32),
        "wq": w(ks[0], (emb_dim, emb_dim)), "bq": b(ks[1], (1, emb_dim)),
        "wk": w(ks[2], (emb_dim, emb_dim)), "bk": b(ks[3], (1, emb_dim)),
        "wv": w(ks[4], (emb_dim, emb_dim)), "bv": b(ks[5], (1, emb_dim)),
        "wo": w(ks[6], (emb_dim, emb_dim)), "bo": b(ks[7], (1, emb_dim)),
        "w1": w(ks[8], (emb_dim, ffn_dim)), "b1": b(ks[9], (1, ffn_dim)),
        "w2": w(ks[10], (ffn_dim, emb_dim)), "b2": b(ks[11], (1, emb_dim)),
    }


if __name__ == "__main__":
    # Small but lane-dense demo shapes (E, F multiples of 128).
    B, S, E = 2, 16, 128      # batch, sequence, emb_dim
    NUM_HEAD = 4              # dh = 32
    FFN_DIM = 256

    key = jax.random.PRNGKey(0)
    kx, kp = jax.random.split(key)
    x = jax.random.normal(kx, (B, S, E), jnp.float32)
    params = init_params(kp, E, FFN_DIM)

    out = vit_layer(x, params, NUM_HEAD, block_b=1)
    out = jax.block_until_ready(out)

    ref = vit_layer_ref(x, params, NUM_HEAD)
    assert out.shape == (B, S, E)
    max_err = float(jnp.max(jnp.abs(out - ref)))
    # bf16 MXU operands + approx reciprocal => loosened tolerance vs f32 reference.
    assert jnp.allclose(out, ref, atol=2e-2, rtol=2e-2), (
        f"mismatch vs JAX reference (max abs err={max_err})")

    print("KERNEL_OK")
</pallas_src>

<mosaic_0001>
module attributes {stable_mosaic.version = 11 : i64} {
  func.func @vit_layer_kernel(%arg0: i32, %arg1: memref<1x16x128xf32, #tpu.memory_space<vmem>>, %arg2: memref<1x128xf32, #tpu.memory_space<vmem>>, %arg3: memref<1x128xf32, #tpu.memory_space<vmem>>, %arg4: memref<128x128xbf16, #tpu.memory_space<vmem>>, %arg5: memref<1x128xf32, #tpu.memory_space<vmem>>, %arg6: memref<128x128xbf16, #tpu.memory_space<vmem>>, %arg7: memref<1x128xf32, #tpu.memory_space<vmem>>, %arg8: memref<128x128xbf16, #tpu.memory_space<vmem>>, %arg9: memref<1x128xf32, #tpu.memory_space<vmem>>, %arg10: memref<128x128xbf16, #tpu.memory_space<vmem>>, %arg11: memref<1x128xf32, #tpu.memory_space<vmem>>, %arg12: memref<1x128xf32, #tpu.memory_space<vmem>>, %arg13: memref<1x128xf32, #tpu.memory_space<vmem>>, %arg14: memref<128x256xbf16, #tpu.memory_space<vmem>>, %arg15: memref<1x256xf32, #tpu.memory_space<vmem>>, %arg16: memref<256x128xbf16, #tpu.memory_space<vmem>>, %arg17: memref<1x128xf32, #tpu.memory_space<vmem>>, %arg18: memref<1x16x128xf32, #tpu.memory_space<vmem>>, %arg19: memref<16x128xf32, #tpu.memory_space<vmem>>) attributes {dimension_semantics = [#tpu.dimension_semantics<parallel>], iteration_bounds = array<i64: 2>, scalar_prefetch = 0 : i64, scratch_operands = 1 : i64, tpu.core_type = #tpu.core_type<tc>, window_params = [{transform_indices = @transform_0, window_bounds = array<i64: 1, 16, 128>}, {pipeline_mode = #tpu.pipeline_mode<synchronous>, transform_indices = @transform_1, window_bounds = array<i64: 1, 128>}, {pipeline_mode = #tpu.pipeline_mode<synchronous>, transform_indices = @transform_2, window_bounds = array<i64: 1, 128>}, {pipeline_mode = #tpu.pipeline_mode<synchronous>, transform_indices = @transform_3, window_bounds = array<i64: 128, 128>}, {pipeline_mode = #tpu.pipeline_mode<synchronous>, transform_indices = @transform_4, window_bounds = array<i64: 1, 128>}, {pipeline_mode = #tpu.pipeline_mode<synchronous>, transform_indices = @transform_5, window_bounds = array<i64: 128, 128>}, {pipeline_mode = #tpu.pipeline_mode<synchronous>, transform_indices = @transform_6, window_bounds = array<i64: 1, 128>}, {pipeline_mode = #tpu.pipeline_mode<synchronous>, transform_indices = @transform_7, window_bounds = array<i64: 128, 128>}, {pipeline_mode = #tpu.pipeline_mode<synchronous>, transform_indices = @transform_8, window_bounds = array<i64: 1, 128>}, {pipeline_mode = #tpu.pipeline_mode<synchronous>, transform_indices = @transform_9, window_bounds = array<i64: 128, 128>}, {pipeline_mode = #tpu.pipeline_mode<synchronous>, transform_indices = @transform_10, window_bounds = array<i64: 1, 128>}, {pipeline_mode = #tpu.pipeline_mode<synchronous>, transform_indices = @transform_11, window_bounds = array<i64: 1, 128>}, {pipeline_mode = #tpu.pipeline_mode<synchronous>, transform_indices = @transform_12, window_bounds = array<i64: 1, 128>}, {pipeline_mode = #tpu.pipeline_mode<synchronous>, transform_indices = @transform_13, window_bounds = array<i64: 128, 256>}, {pipeline_mode = #tpu.pipeline_mode<synchronous>, transform_indices = @transform_14, window_bounds = array<i64: 1, 256>}, {pipeline_mode = #tpu.pipeline_mode<synchronous>, transform_indices = @transform_15, window_bounds = array<i64: 256, 128>}, {pipeline_mode = #tpu.pipeline_mode<synchronous>, transform_indices = @transform_16, window_bounds = array<i64: 1, 128>}, {transform_indices = @transform_17, window_bounds = array<i64: 1, 16, 128>}]} {
    %c0 = arith.constant 0 : index
    %c0_0 = arith.constant 0 : index
    %c0_1 = arith.constant 0 : index
    %0 = vector.load %arg1[%c0, %c0_0, %c0_1] : memref<1x16x128xf32, #tpu.memory_space<vmem>>, vector<1x16x128xf32>
    %1 = vector.shape_cast %0 : vector<1x16x128xf32> to vector<16x128xf32>
    %c0_2 = arith.constant 0 : index
    %c0_3 = arith.constant 0 : index
    %2 = vector.load %arg2[%c0_2, %c0_3] : memref<1x128xf32, #tpu.memory_space<vmem>>, vector<1x128xf32>
    %c0_4 = arith.constant 0 : index
    %c0_5 = arith.constant 0 : index
    %3 = vector.load %arg3[%c0_4, %c0_5] : memref<1x128xf32, #tpu.memory_space<vmem>>, vector<1x128xf32>
    %cst = arith.constant dense<0.000000e+00> : vector<16xf32>
    %4 = vector.multi_reduction <add>, %1, %cst [1] : vector<16x128xf32> to vector<16xf32>
    %5 = vector.shape_cast %4 : vector<16xf32> to vector<16x1xf32>
    %cst_6 = arith.constant 1.280000e+02 : f32
    %6 = vector.broadcast %cst_6 : f32 to vector<16x1xf32>
    %7 = arith.divf %5, %6 : vector<16x1xf32>
    %8 = vector.broadcast %7 : vector<16x1xf32> to vector<16x128xf32>
    %9 = arith.subf %1, %8 : vector<16x128xf32>
    %10 = arith.mulf %9, %9 : vector<16x128xf32>
    %cst_7 = arith.constant dense<0.000000e+00> : vector<16xf32>
    %11 = vector.multi_reduction <add>, %10, %cst_7 [1] : vector<16x128xf32> to vector<16xf32>
    %12 = vector.shape_cast %11 : vector<16xf32> to vector<16x1xf32>
    %cst_8 = arith.constant 1.280000e+02 : f32
    %13 = vector.broadcast %cst_8 : f32 to vector<16x1xf32>
    %14 = arith.divf %12, %13 : vector<16x1xf32>
    %15 = vector.broadcast %7 : vector<16x1xf32> to vector<16x128xf32>
    %16 = arith.subf %1, %15 : vector<16x128xf32>
    %cst_9 = arith.constant 9.99999974E-6 : f32
    %17 = vector.broadcast %cst_9 : f32 to vector<16x1xf32>
    %18 = arith.addf %14, %17 : vector<16x1xf32>
    %19 = math.rsqrt %18 : vector<16x1xf32>
    %20 = vector.broadcast %19 : vector<16x1xf32> to vector<16x128xf32>
    %21 = arith.mulf %16, %20 : vector<16x128xf32>
    %22 = vector.broadcast %2 : vector<1x128xf32> to vector<16x128xf32>
    %23 = arith.mulf %21, %22 : vector<16x128xf32>
    %24 = vector.broadcast %3 : vector<1x128xf32> to vector<16x128xf32>
    %25 = arith.addf %23, %24 : vector<16x128xf32>
    %26 = arith.truncf %25 : vector<16x128xf32> to vector<16x128xbf16>
    %c0_10 = arith.constant 0 : index
    %c0_11 = arith.constant 0 : index
    %27 = vector.load %arg4[%c0_10, %c0_11] : memref<128x128xbf16, #tpu.memory_space<vmem>>, vector<128x128xbf16>
    %cst_12 = arith.constant dense<0.000000e+00> : vector<16x128xf32>
    %28 = tpu.matmul %26, %27, %cst_12 {dimension_numbers = #tpu.dot_dimension_numbers<[1], [0], [0], [1], [0, 0, 1, 1], [], []>} : vector<16x128xbf16>, vector<128x128xbf16>, vector<16x128xf32> -> vector<16x128xf32>
    %c0_13 = arith.constant 0 : index
    %c0_14 = arith.constant 0 : index
    %29 = vector.load %arg5[%c0_13, %c0_14] : memref<1x128xf32, #tpu.memory_space<vmem>>, vector<1x128xf32>
    %30 = vector.broadcast %29 : vector<1x128xf32> to vector<16x128xf32>
    %31 = arith.addf %28, %30 : vector<16x128xf32>
    %c0_15 = arith.constant 0 : index
    %c0_16 = arith.constant 0 : index
    %32 = vector.load %arg6[%c0_15, %c0_16] : memref<128x128xbf16, #tpu.memory_space<vmem>>, vector<128x128xbf16>
    %cst_17 = arith.constant dense<0.000000e+00> : vector<16x128xf32>
    %33 = tpu.matmul %26, %32, %cst_17 {dimension_numbers = #tpu.dot_dimension_numbers<[1], [0], [0], [1], [0, 0, 1, 1], [], []>} : vector<16x128xbf16>, vector<128x128xbf16>, vector<16x128xf32> -> vector<16x128xf32>
    %c0_18 = arith.constant 0 : index
    %c0_19 = arith.constant 0 : index
    %34 = vector.load %arg7[%c0_18, %c0_19] : memref<1x128xf32, #tpu.memory_space<vmem>>, vector<1x128xf32>
    %35 = vector.broadcast %34 : vector<1x128xf32> to vector<16x128xf32>
    %36 = arith.addf %33, %35 : vector<16x128xf32>
    %c0_20 = arith.constant 0 : index
    %c0_21 = arith.constant 0 : index
    %37 = vector.load %arg8[%c0_20, %c0_21] : memref<128x128xbf16, #tpu.memory_space<vmem>>, vector<128x128xbf16>
    %cst_22 = arith.constant dense<0.000000e+00> : vector<16x128xf32>
    %38 = tpu.matmul %26, %37, %cst_22 {dimension_numbers = #tpu.dot_dimension_numbers<[1], [0], [0], [1], [0, 0, 1, 1], [], []>} : vector<16x128xbf16>, vector<128x128xbf16>, vector<16x128xf32> -> vector<16x128xf32>
    %c0_23 = arith.constant 0 : index
    %c0_24 = arith.constant 0 : index
    %39 = vector.load %arg9[%c0_23, %c0_24] : memref<1x128xf32, #tpu.memory_space<vmem>>, vector<1x128xf32>
    %40 = vector.broadcast %39 : vector<1x128xf32> to vector<16x128xf32>
    %41 = arith.addf %38, %40 : vector<16x128xf32>
    %42 = vector.extract_strided_slice %31 {offsets = [0, 0], sizes = [16, 32], strides = [1, 1]} : vector<16x128xf32> to vector<16x32xf32>
    %cst_25 = arith.constant 0.176776692 : f32
    %43 = vector.broadcast %cst_25 : f32 to vector<16x32xf32>
    %44 = arith.mulf %42, %43 : vector<16x32xf32>
    %45 = arith.truncf %44 : vector<16x32xf32> to vector<16x32xbf16>
    %46 = vector.extract_strided_slice %36 {offsets = [0, 0], sizes = [16, 32], strides = [1, 1]} : vector<16x128xf32> to vector<16x32xf32>
    %47 = arith.truncf %46 : vector<16x32xf32> to vector<16x32xbf16>
    %48 = vector.extract_strided_slice %41 {offsets = [0, 0], sizes = [16, 32], strides = [1, 1]} : vector<16x128xf32> to vector<16x32xf32>
    %49 = arith.truncf %48 : vector<16x32xf32> to vector<16x32xbf16>
    %cst_26 = arith.constant dense<0.000000e+00> : vector<16x16xf32>
    %50 = tpu.matmul %45, %47, %cst_26 {dimension_numbers = #tpu.dot_dimension_numbers<[1], [1], [0], [0], [0, 0, 1, 0], [], []>} : vector<16x32xbf16>, vector<16x32xbf16>, vector<16x16xf32> -> vector<16x16xf32>
    %cst_27 = arith.constant dense<0xFF800000> : vector<16xf32>
    %51 = vector.multi_reduction <maximumf>, %50, %cst_27 [1] : vector<16x16xf32> to vector<16xf32>
    %52 = vector.shape_cast %51 : vector<16xf32> to vector<16x1xf32>
    %53 = vector.broadcast %52 : vector<16x1xf32> to vector<16x16xf32>
    %54 = arith.subf %50, %53 : vector<16x16xf32>
    %55 = math.exp %54 : vector<16x16xf32>
    %cst_28 = arith.constant dense<0.000000e+00> : vector<16xf32>
    %56 = vector.multi_reduction <add>, %55, %cst_28 [1] : vector<16x16xf32> to vector<16xf32>
    %57 = vector.shape_cast %56 : vector<16xf32> to vector<16x1xf32>
    %58 = tpu.reciprocal %57 {approx = true} : vector<16x1xf32> -> vector<16x1xf32>
    %59 = vector.broadcast %58 : vector<16x1xf32> to vector<16x16xf32>
    %60 = arith.mulf %55, %59 : vector<16x16xf32>
    %61 = arith.truncf %60 : vector<16x16xf32> to vector<16x16xbf16>
    %cst_29 = arith.constant dense<0.000000e+00> : vector<16x32xf32>
    %62 = tpu.matmul %61, %49, %cst_29 {dimension_numbers = #tpu.dot_dimension_numbers<[1], [0], [0], [1], [0, 0, 1, 1], [], []>} : vector<16x16xbf16>, vector<16x32xbf16>, vector<16x32xf32> -> vector<16x32xf32>
    %c0_30 = arith.constant 0 : index
    %c0_31 = arith.constant 0 : index
    %63 = vector.load %arg19[%c0_30, %c0_31] : memref<16x128xf32, #tpu.memory_space<vmem>>, vector<16x32xf32>
    tpu.vector_store %arg19[%c0_30, %c0_31], %62 {strides = array<i32>} : memref<16x128xf32, #tpu.memory_space<vmem>>, vector<16x32xf32>,
    %64 = vector.extract_strided_slice %31 {offsets = [0, 32], sizes = [16, 32], strides = [1, 1]} : vector<16x128xf32> to vector<16x32xf32>
    %cst_32 = arith.constant 0.176776692 : f32
    %65 = vector.broadcast %cst_32 : f32 to vector<16x32xf32>
    %66 = arith.mulf %64, %65 : vector<16x32xf32>
    %67 = arith.truncf %66 : vector<16x32xf32> to vector<16x32xbf16>
    %68 = vector.extract_strided_slice %36 {offsets = [0, 32], sizes = [16, 32], strides = [1, 1]} : vector<16x128xf32> to vector<16x32xf32>
    %69 = arith.truncf %68 : vector<16x32xf32> to vector<16x32xbf16>
    %70 = vector.extract_strided_slice %41 {offsets = [0, 32], sizes = [16, 32], strides = [1, 1]} : vector<16x128xf32> to vector<16x32xf32>
    %71 = arith.truncf %70 : vector<16x32xf32> to vector<16x32xbf16>
    %cst_33 = arith.constant dense<0.000000e+00> : vector<16x16xf32>
    %72 = tpu.matmul %67, %69, %cst_33 {dimension_numbers = #tpu.dot_dimension_numbers<[1], [1], [0], [0], [0, 0, 1, 0], [], []>} : vector<16x32xbf16>, vector<16x32xbf16>, vector<16x16xf32> -> vector<16x16xf32>
    %cst_34 = arith.constant dense<0xFF800000> : vector<16xf32>
    %73 = vector.multi_reduction <maximumf>, %72, %cst_34 [1] : vector<16x16xf32> to vector<16xf32>
    %74 = vector.shape_cast %73 : vector<16xf32> to vector<16x1xf32>
    %75 = vector.broadcast %74 : vector<16x1xf32> to vector<16x16xf32>
    %76 = arith.subf %72, %75 : vector<16x16xf32>
    %77 = math.exp %76 : vector<16x16xf32>
    %cst_35 = arith.constant dense<0.000000e+00> : vector<16xf32>
    %78 = vector.multi_reduction <add>, %77, %cst_35 [1] : vector<16x16xf32> to vector<16xf32>
    %79 = vector.shape_cast %78 : vector<16xf32> to vector<16x1xf32>
    %80 = tpu.reciprocal %79 {approx = true} : vector<16x1xf32> -> vector<16x1xf32>
    %81 = vector.broadcast %80 : vector<16x1xf32> to vector<16x16xf32>
    %82 = arith.mulf %77, %81 : vector<16x16xf32>
    %83 = arith.truncf %82 : vector<16x16xf32> to vector<16x16xbf16>
    %cst_36 = arith.constant dense<0.000000e+00> : vector<16x32xf32>
    %84 = tpu.matmul %83, %71, %cst_36 {dimension_numbers = #tpu.dot_dimension_numbers<[1], [0], [0], [1], [0, 0, 1, 1], [], []>} : vector<16x16xbf16>, vector<16x32xbf16>, vector<16x32xf32> -> vector<16x32xf32>
    %c0_37 = arith.constant 0 : index
    %c32 = arith.constant 32 : index
    %85 = vector.load %arg19[%c0_37, %c32] : memref<16x128xf32, #tpu.memory_space<vmem>>, vector<16x32xf32>
    tpu.vector_store %arg19[%c0_37, %c32], %84 {strides = array<i32>} : memref<16x128xf32, #tpu.memory_space<vmem>>, vector<16x32xf32>,
    %86 = vector.extract_strided_slice %31 {offsets = [0, 64], sizes = [16, 32], strides = [1, 1]} : vector<16x128xf32> to vector<16x32xf32>
    %cst_38 = arith.constant 0.176776692 : f32
    %87 = vector.broadcast %cst_38 : f32 to vector<16x32xf32>
    %88 = arith.mulf %86, %87 : vector<16x32xf32>
    %89 = arith.truncf %88 : vector<16x32xf32> to vector<16x32xbf16>
    %90 = vector.extract_strided_slice %36 {offsets = [0, 64], sizes = [16, 32], strides = [1, 1]} : vector<16x128xf32> to vector<16x32xf32>
    %91 = arith.truncf %90 : vector<16x32xf32> to vector<16x32xbf16>
    %92 = vector.extract_strided_slice %41 {offsets = [0, 64], sizes = [16, 32], strides = [1, 1]} : vector<16x128xf32> to vector<16x32xf32>
    %93 = arith.truncf %92 : vector<16x32xf32> to vector<16x32xbf16>
    %cst_39 = arith.constant dense<0.000000e+00> : vector<16x16xf32>
    %94 = tpu.matmul %89, %91, %cst_39 {dimension_numbers = #tpu.dot_dimension_numbers<[1], [1], [0], [0], [0, 0, 1, 0], [], []>} : vector<16x32xbf16>, vector<16x32xbf16>, vector<16x16xf32> -> vector<16x16xf32>
    %cst_40 = arith.constant dense<0xFF800000> : vector<16xf32>
    %95 = vector.multi_reduction <maximumf>, %94, %cst_40 [1] : vector<16x16xf32> to vector<16xf32>
    %96 = vector.shape_cast %95 : vector<16xf32> to vector<16x1xf32>
    %97 = vector.broadcast %96 : vector<16x1xf32> to vector<16x16xf32>
    %98 = arith.subf %94, %97 : vector<16x16xf32>
    %99 = math.exp %98 : vector<16x16xf32>
    %cst_41 = arith.constant dense<0.000000e+00> : vector<16xf32>
    %100 = vector.multi_reduction <add>, %99, %cst_41 [1] : vector<16x16xf32> to vector<16xf32>
    %101 = vector.shape_cast %100 : vector<16xf32> to vector<16x1xf32>
    %102 = tpu.reciprocal %101 {approx = true} : vector<16x1xf32> -> vector<16x1xf32>
    %103 = vector.broadcast %102 : vector<16x1xf32> to vector<16x16xf32>
    %104 = arith.mulf %99, %103 : vector<16x16xf32>
    %105 = arith.truncf %104 : vector<16x16xf32> to vector<16x16xbf16>
    %cst_42 = arith.constant dense<0.000000e+00> : vector<16x32xf32>
    %106 = tpu.matmul %105, %93, %cst_42 {dimension_numbers = #tpu.dot_dimension_numbers<[1], [0], [0], [1], [0, 0, 1, 1], [], []>} : vector<16x16xbf16>, vector<16x32xbf16>, vector<16x32xf32> -> vector<16x32xf32>
    %c0_43 = arith.constant 0 : index
    %c64 = arith.constant 64 : index
    %107 = vector.load %arg19[%c0_43, %c64] : memref<16x128xf32, #tpu.memory_space<vmem>>, vector<16x32xf32>
    tpu.vector_store %arg19[%c0_43, %c64], %106 {strides = array<i32>} : memref<16x128xf32, #tpu.memory_space<vmem>>, vector<16x32xf32>,
    %108 = vector.extract_strided_slice %31 {offsets = [0, 96], sizes = [16, 32], strides = [1, 1]} : vector<16x128xf32> to vector<16x32xf32>
    %cst_44 = arith.constant 0.176776692 : f32
    %109 = vector.broadcast %cst_44 : f32 to vector<16x32xf32>
    %110 = arith.mulf %108, %109 : vector<16x32xf32>
    %111 = arith.truncf %110 : vector<16x32xf32> to vector<16x32xbf16>
    %112 = vector.extract_strided_slice %36 {offsets = [0, 96], sizes = [16, 32], strides = [1, 1]} : vector<16x128xf32> to vector<16x32xf32>
    %113 = arith.truncf %112 : vector<16x32xf32> to vector<16x32xbf16>
    %114 = vector.extract_strided_slice %41 {offsets = [0, 96], sizes = [16, 32], strides = [1, 1]} : vector<16x128xf32> to vector<16x32xf32>
    %115 = arith.truncf %114 : vector<16x32xf32> to vector<16x32xbf16>
    %cst_45 = arith.constant dense<0.000000e+00> : vector<16x16xf32>
    %116 = tpu.matmul %111, %113, %cst_45 {dimension_numbers = #tpu.dot_dimension_numbers<[1], [1], [0], [0], [0, 0, 1, 0], [], []>} : vector<16x32xbf16>, vector<16x32xbf16>, vector<16x16xf32> -> vector<16x16xf32>
    %cst_46 = arith.constant dense<0xFF800000> : vector<16xf32>
    %117 = vector.multi_reduction <maximumf>, %116, %cst_46 [1] : vector<16x16xf32> to vector<16xf32>
    %118 = vector.shape_cast %117 : vector<16xf32> to vector<16x1xf32>
    %119 = vector.broadcast %118 : vector<16x1xf32> to vector<16x16xf32>
    %120 = arith.subf %116, %119 : vector<16x16xf32>
    %121 = math.exp %120 : vector<16x16xf32>
    %cst_47 = arith.constant dense<0.000000e+00> : vector<16xf32>
    %122 = vector.multi_reduction <add>, %121, %cst_47 [1] : vector<16x16xf32> to vector<16xf32>
    %123 = vector.shape_cast %122 : vector<16xf32> to vector<16x1xf32>
    %124 = tpu.reciprocal %123 {approx = true} : vector<16x1xf32> -> vector<16x1xf32>
    %125 = vector.broadcast %124 : vector<16x1xf32> to vector<16x16xf32>
    %126 = arith.mulf %121, %125 : vector<16x16xf32>
    %127 = arith.truncf %126 : vector<16x16xf32> to vector<16x16xbf16>
    %cst_48 = arith.constant dense<0.000000e+00> : vector<16x32xf32>
    %128 = tpu.matmul %127, %115, %cst_48 {dimension_numbers = #tpu.dot_dimension_numbers<[1], [0], [0], [1], [0, 0, 1, 1], [], []>} : vector<16x16xbf16>, vector<16x32xbf16>, vector<16x32xf32> -> vector<16x32xf32>
    %c0_49 = arith.constant 0 : index
    %c96 = arith.constant 96 : index
    %129 = vector.load %arg19[%c0_49, %c96] : memref<16x128xf32, #tpu.memory_space<vmem>>, vector<16x32xf32>
    tpu.vector_store %arg19[%c0_49, %c96], %128 {strides = array<i32>} : memref<16x128xf32, #tpu.memory_space<vmem>>, vector<16x32xf32>,
    %c0_50 = arith.constant 0 : index
    %c0_51 = arith.constant 0 : index
    %130 = vector.load %arg19[%c0_50, %c0_51] : memref<16x128xf32, #tpu.memory_space<vmem>>, vector<16x128xf32>
    %131 = arith.truncf %130 : vector<16x128xf32> to vector<16x128xbf16>
    %c0_52 = arith.constant 0 : index
    %c0_53 = arith.constant 0 : index
    %132 = vector.load %arg10[%c0_52, %c0_53] : memref<128x128xbf16, #tpu.memory_space<vmem>>, vector<128x128xbf16>
    %cst_54 = arith.constant dense<0.000000e+00> : vector<16x128xf32>
    %133 = tpu.matmul %131, %132, %cst_54 {dimension_numbers = #tpu.dot_dimension_numbers<[1], [0], [0], [1], [0, 0, 1, 1], [], []>} : vector<16x128xbf16>, vector<128x128xbf16>, vector<16x128xf32> -> vector<16x128xf32>
    %c0_55 = arith.constant 0 : index
    %c0_56 = arith.constant 0 : index
    %134 = vector.load %arg11[%c0_55, %c0_56] : memref<1x128xf32, #tpu.memory_space<vmem>>, vector<1x128xf32>
    %135 = vector.broadcast %134 : vector<1x128xf32> to vector<16x128xf32>
    %136 = arith.addf %133, %135 : vector<16x128xf32>
    %137 = arith.addf %136, %1 : vector<16x128xf32>
    %c0_57 = arith.constant 0 : index
    %c0_58 = arith.constant 0 : index
    %138 = vector.load %arg12[%c0_57, %c0_58] : memref<1x128xf32, #tpu.memory_space<vmem>>, vector<1x128xf32>
    %c0_59 = arith.constant 0 : index
    %c0_60 = arith.constant 0 : index
    %139 = vector.load %arg13[%c0_59, %c0_60] : memref<1x128xf32, #tpu.memory_space<vmem>>, vector<1x128xf32>
    %cst_61 = arith.constant dense<0.000000e+00> : vector<16xf32>
    %140 = vector.multi_reduction <add>, %137, %cst_61 [1] : vector<16x128xf32> to vector<16xf32>
    %141 = vector.shape_cast %140 : vector<16xf32> to vector<16x1xf32>
    %cst_62 = arith.constant 1.280000e+02 : f32
    %142 = vector.broadcast %cst_62 : f32 to vector<16x1xf32>
    %143 = arith.divf %141, %142 : vector<16x1xf32>
    %144 = vector.broadcast %143 : vector<16x1xf32> to vector<16x128xf32>
    %145 = arith.subf %137, %144 : vector<16x128xf32>
    %146 = arith.mulf %145, %145 : vector<16x128xf32>
    %cst_63 = arith.constant dense<0.000000e+00> : vector<16xf32>
    %147 = vector.multi_reduction <add>, %146, %cst_63 [1] : vector<16x128xf32> to vector<16xf32>
    %148 = vector.shape_cast %147 : vector<16xf32> to vector<16x1xf32>
    %cst_64 = arith.constant 1.280000e+02 : f32
    %149 = vector.broadcast %cst_64 : f32 to vector<16x1xf32>
    %150 = arith.divf %148, %149 : vector<16x1xf32>
    %151 = vector.broadcast %143 : vector<16x1xf32> to vector<16x128xf32>
    %152 = arith.subf %137, %151 : vector<16x128xf32>
    %cst_65 = arith.constant 9.99999974E-6 : f32
    %153 = vector.broadcast %cst_65 : f32 to vector<16x1xf32>
    %154 = arith.addf %150, %153 : vector<16x1xf32>
    %155 = math.rsqrt %154 : vector<16x1xf32>
    %156 = vector.broadcast %155 : vector<16x1xf32> to vector<16x128xf32>
    %157 = arith.mulf %152, %156 : vector<16x128xf32>
    %158 = vector.broadcast %138 : vector<1x128xf32> to vector<16x128xf32>
    %159 = arith.mulf %157, %158 : vector<16x128xf32>
    %160 = vector.broadcast %139 : vector<1x128xf32> to vector<16x128xf32>
    %161 = arith.addf %159, %160 : vector<16x128xf32>
    %162 = arith.truncf %161 : vector<16x128xf32> to vector<16x128xbf16>
    %c0_66 = arith.constant 0 : index
    %c0_67 = arith.constant 0 : index
    %163 = vector.load %arg14[%c0_66, %c0_67] : memref<128x256xbf16, #tpu.memory_space<vmem>>, vector<128x256xbf16>
    %cst_68 = arith.constant dense<0.000000e+00> : vector<16x256xf32>
    %164 = tpu.matmul %162, %163, %cst_68 {dimension_numbers = #tpu.dot_dimension_numbers<[1], [0], [0], [1], [0, 0, 1, 1], [], []>} : vector<16x128xbf16>, vector<128x256xbf16>, vector<16x256xf32> -> vector<16x256xf32>
    %c0_69 = arith.constant 0 : index
    %c0_70 = arith.constant 0 : index
    %165 = vector.load %arg15[%c0_69, %c0_70] : memref<1x256xf32, #tpu.memory_space<vmem>>, vector<1x256xf32>
    %166 = vector.broadcast %165 : vector<1x256xf32> to vector<16x256xf32>
    %167 = arith.addf %164, %166 : vector<16x256xf32>
    %cst_71 = arith.constant 5.000000e-01 : f32
    %168 = vector.broadcast %cst_71 : f32 to vector<16x256xf32>
    %169 = arith.mulf %168, %167 : vector<16x256xf32>
    %cst_72 = arith.constant 0.707106769 : f32
    %170 = vector.broadcast %cst_72 : f32 to vector<16x256xf32>
    %171 = arith.mulf %167, %170 : vector<16x256xf32>
    %172 = math.absf %171 : vector<16x256xf32>
    %cst_73 = arith.constant 0.327591091 : f32
    %173 = vector.broadcast %cst_73 : f32 to vector<16x256xf32>
    %174 = arith.mulf %173, %172 : vector<16x256xf32>
    %cst_74 = arith.constant 1.000000e+00 : f32
    %175 = vector.broadcast %cst_74 : f32 to vector<16x256xf32>
    %176 = arith.addf %175, %174 : vector<16x256xf32>
    %177 = tpu.reciprocal %176 : vector<16x256xf32> -> vector<16x256xf32>
    %cst_75 = arith.constant 1.06140542 : f32
    %178 = vector.broadcast %cst_75 : f32 to vector<16x256xf32>
    %179 = arith.mulf %178, %177 : vector<16x256xf32>
    %cst_76 = arith.constant -1.45315206 : f32
    %180 = vector.broadcast %cst_76 : f32 to vector<16x256xf32>
    %181 = arith.addf %179, %180 : vector<16x256xf32>
    %182 = arith.mulf %181, %177 : vector<16x256xf32>
    %cst_77 = arith.constant 1.42141378 : f32
    %183 = vector.broadcast %cst_77 : f32 to vector<16x256xf32>
    %184 = arith.addf %182, %183 : vector<16x256xf32>
    %185 = arith.mulf %184, %177 : vector<16x256xf32>
    %cst_78 = arith.constant -0.284496725 : f32
    %186 = vector.broadcast %cst_78 : f32 to vector<16x256xf32>
    %187 = arith.addf %185, %186 : vector<16x256xf32>
    %188 = arith.mulf %187, %177 : vector<16x256xf32>
    %cst_79 = arith.constant 0.254829586 : f32
    %189 = vector.broadcast %cst_79 : f32 to vector<16x256xf32>
    %190 = arith.addf %188, %189 : vector<16x256xf32>
    %191 = arith.mulf %190, %177 : vector<16x256xf32>
    %cst_80 = arith.constant 0.000000e+00 : f32
    %192 = vector.broadcast %cst_80 : f32 to vector<16x256xf32>
    %193 = arith.subf %192, %172 : vector<16x256xf32>
    %194 = arith.mulf %193, %172 : vector<16x256xf32>
    %195 = math.exp %194 : vector<16x256xf32>
    %196 = arith.mulf %191, %195 : vector<16x256xf32>
    %cst_81 = arith.constant 1.000000e+00 : f32
    %197 = vector.broadcast %cst_81 : f32 to vector<16x256xf32>
    %198 = arith.subf %197, %196 : vector<16x256xf32>
    %cst_82 = arith.constant 0.000000e+00 : f32
    %199 = vector.broadcast %cst_82 : f32 to vector<16x256xf32>
    %200 = arith.cmpf oge, %171, %199 : vector<16x256xf32>
    %cst_83 = arith.constant 0.000000e+00 : f32
    %201 = vector.broadcast %cst_83 : f32 to vector<16x256xf32>
    %202 = arith.subf %201, %198 : vector<16x256xf32>
    %203 = arith.select %200, %198, %202 : vector<16x256xi1>, vector<16x256xf32>
    %cst_84 = arith.constant 1.000000e+00 : f32
    %204 = vector.broadcast %cst_84 : f32 to vector<16x256xf32>
    %205 = arith.addf %204, %203 : vector<16x256xf32>
    %206 = arith.mulf %169, %205 : vector<16x256xf32>
    %207 = arith.truncf %206 : vector<16x256xf32> to vector<16x256xbf16>
    %c0_85 = arith.constant 0 : index
    %c0_86 = arith.constant 0 : index
    %208 = vector.load %arg16[%c0_85, %c0_86] : memref<256x128xbf16, #tpu.memory_space<vmem>>, vector<256x128xbf16>
    %cst_87 = arith.constant dense<0.000000e+00> : vector<16x128xf32>
    %209 = tpu.matmul %207, %208, %cst_87 {dimension_numbers = #tpu.dot_dimension_numbers<[1], [0], [0], [1], [0, 0, 1, 1], [], []>} : vector<16x256xbf16>, vector<256x128xbf16>, vector<16x128xf32> -> vector<16x128xf32>
    %c0_88 = arith.constant 0 : index
    %c0_89 = arith.constant 0 : index
    %210 = vector.load %arg17[%c0_88, %c0_89] : memref<1x128xf32, #tpu.memory_space<vmem>>, vector<1x128xf32>
    %211 = vector.broadcast %210 : vector<1x128xf32> to vector<16x128xf32>
    %212 = arith.addf %209, %211 : vector<16x128xf32>
    %213 = arith.addf %212, %137 : vector<16x128xf32>
    %214 = vector.shape_cast %213 : vector<16x128xf32> to vector<1x16x128xf32>
    %c0_90 = arith.constant 0 : index
    %c0_91 = arith.constant 0 : index
    %c0_92 = arith.constant 0 : index
    %215 = vector.load %arg18[%c0_90, %c0_91, %c0_92] : memref<1x16x128xf32, #tpu.memory_space<vmem>>, vector<1x16x128xf32>
    tpu.vector_store %arg18[%c0_90, %c0_91, %c0_92], %214 {strides = array<i32>} : memref<1x16x128xf32, #tpu.memory_space<vmem>>, vector<1x16x128xf32>,
    return
  }
  func.func @transform_0(%arg0: i32) -> (i32, i32, i32) {
    %c0_i32 = arith.constant 0 : i32
    %c0_i32_0 = arith.constant 0 : i32
    %c0_i32_1 = arith.constant 0 : i32
    return %arg0, %c0_i32, %c0_i32_0 : i32, i32, i32
  }
  func.func @transform_1(%arg0: i32) -> (i32, i32) {
    %c0_i32 = arith.constant 0 : i32
    %c0_i32_0 = arith.constant 0 : i32
    %c0_i32_1 = arith.constant 0 : i32
    return %c0_i32, %c0_i32_0 : i32, i32
  }
  func.func @transform_2(%arg0: i32) -> (i32, i32) {
    %c0_i32 = arith.constant 0 : i32
    %c0_i32_0 = arith.constant 0 : i32
    %c0_i32_1 = arith.constant 0 : i32
    return %c0_i32, %c0_i32_0 : i32, i32
  }
  func.func @transform_3(%arg0: i32) -> (i32, i32) {
    %c0_i32 = arith.constant 0 : i32
    %c0_i32_0 = arith.constant 0 : i32
    %c0_i32_1 = arith.constant 0 : i32
    return %c0_i32, %c0_i32_0 : i32, i32
  }
  func.func @transform_4(%arg0: i32) -> (i32, i32) {
    %c0_i32 = arith.constant 0 : i32
    %c0_i32_0 = arith.constant 0 : i32
    %c0_i32_1 = arith.constant 0 : i32
    return %c0_i32, %c0_i32_0 : i32, i32
  }
  func.func @transform_5(%arg0: i32) -> (i32, i32) {
    %c0_i32 = arith.constant 0 : i32
    %c0_i32_0 = arith.constant 0 : i32
    %c0_i32_1 = arith.constant 0 : i32
    return %c0_i32, %c0_i32_0 : i32, i32
  }
  func.func @transform_6(%arg0: i32) -> (i32, i32) {
    %c0_i32 = arith.constant 0 : i32
    %c0_i32_0 = arith.constant 0 : i32
    %c0_i32_1 = arith.constant 0 : i32
    return %c0_i32, %c0_i32_0 : i32, i32
  }
  func.func @transform_7(%arg0: i32) -> (i32, i32) {
    %c0_i32 = arith.constant 0 : i32
    %c0_i32_0 = arith.constant 0 : i32
    %c0_i32_1 = arith.constant 0 : i32
    return %c0_i32, %c0_i32_0 : i32, i32
  }
  func.func @transform_8(%arg0: i32) -> (i32, i32) {
    %c0_i32 = arith.constant 0 : i32
    %c0_i32_0 = arith.constant 0 : i32
    %c0_i32_1 = arith.constant 0 : i32
    return %c0_i32, %c0_i32_0 : i32, i32
  }
  func.func @transform_9(%arg0: i32) -> (i32, i32) {
    %c0_i32 = arith.constant 0 : i32
    %c0_i32_0 = arith.constant 0 : i32
    %c0_i32_1 = arith.constant 0 : i32
    return %c0_i32, %c0_i32_0 : i32, i32
  }
  func.func @transform_10(%arg0: i32) -> (i32, i32) {
    %c0_i32 = arith.constant 0 : i32
    %c0_i32_0 = arith.constant 0 : i32
    %c0_i32_1 = arith.constant 0 : i32
    return %c0_i32, %c0_i32_0 : i32, i32
  }
  func.func @transform_11(%arg0: i32) -> (i32, i32) {
    %c0_i32 = arith.constant 0 : i32
    %c0_i32_0 = arith.constant 0 : i32
    %c0_i32_1 = arith.constant 0 : i32
    return %c0_i32, %c0_i32_0 : i32, i32
  }
  func.func @transform_12(%arg0: i32) -> (i32, i32) {
    %c0_i32 = arith.constant 0 : i32
    %c0_i32_0 = arith.constant 0 : i32
    %c0_i32_1 = arith.constant 0 : i32
    return %c0_i32, %c0_i32_0 : i32, i32
  }
  func.func @transform_13(%arg0: i32) -> (i32, i32) {
    %c0_i32 = arith.constant 0 : i32
    %c0_i32_0 = arith.constant 0 : i32
    %c0_i32_1 = arith.constant 0 : i32
    return %c0_i32, %c0_i32_0 : i32, i32
  }
  func.func @transform_14(%arg0: i32) -> (i32, i32) {
    %c0_i32 = arith.constant 0 : i32
    %c0_i32_0 = arith.constant 0 : i32
    %c0_i32_1 = arith.constant 0 : i32
    return %c0_i32, %c0_i32_0 : i32, i32
  }
  func.func @transform_15(%arg0: i32) -> (i32, i32) {
    %c0_i32 = arith.constant 0 : i32
    %c0_i32_0 = arith.constant 0 : i32
    %c0_i32_1 = arith.constant 0 : i32
    return %c0_i32, %c0_i32_0 : i32, i32
  }
  func.func @transform_16(%arg0: i32) -> (i32, i32) {
    %c0_i32 = arith.constant 0 : i32
    %c0_i32_0 = arith.constant 0 : i32
    %c0_i32_1 = arith.constant 0 : i32
    return %c0_i32, %c0_i32_0 : i32, i32
  }
  func.func @transform_17(%arg0: i32) -> (i32, i32, i32) {
    %c0_i32 = arith.constant 0 : i32
    %c0_i32_0 = arith.constant 0 : i32
    %c0_i32_1 = arith.constant 0 : i32
    return %arg0, %c0_i32, %c0_i32_0 : i32, i32, i32
  }
}

</mosaic_0001>

<llo_original>
// kernel: tpu_custom_call.1
$region0: #{tpu_custom_call.1}
  #allocation0 [shape = 'u32[]', space=smem, size = 0x4, offset = 0x4, fixed_abs, tag = 'smem constant byte address 0x4 - core index']
  #allocation1 [shape = 'u32[144,128]{1,0:T(1,128)}', space=vmem, size = 0x12000, scoped, tag = 'internal scratch']
  #allocation2 [shape = 'f32[16,128]{1,0:T(8,128)}', space=vmem, size = 0x2000, scoped, tag = 'scratch operand']
  %s0 = inlined_call_operand.hbm [shape: f32[2,16,128], index: 0, kind: input, shape index: {}]
  %s1 = inlined_call_operand.vmem [shape: f32[1,128], index: 1, kind: input, shape index: {}]
  %s2 = inlined_call_operand.vmem [shape: f32[1,128], index: 2, kind: input, shape index: {}]
  %s3 = inlined_call_operand.hbm [shape: bf16[128,128], index: 3, kind: input, shape index: {}]
  %s4 = inlined_call_operand.vmem [shape: f32[1,128], index: 4, kind: input, shape index: {}]
  %s5 = inlined_call_operand.hbm [shape: bf16[128,128], index: 5, kind: input, shape index: {}]
  %s6 = inlined_call_operand.vmem [shape: f32[1,128], index: 6, kind: input, shape index: {}]
  %s7 = inlined_call_operand.hbm [shape: bf16[128,128], index: 7, kind: input, shape index: {}]
  %s8 = inlined_call_operand.vmem [shape: f32[1,128], index: 8, kind: input, shape index: {}]
  %s9 = inlined_call_operand.hbm [shape: bf16[128,128], index: 9, kind: input, shape index: {}]
  %s10 = inlined_call_operand.vmem [shape: f32[1,128], index: 10, kind: input, shape index: {}]
  %s11 = inlined_call_operand.vmem [shape: f32[1,128], index: 11, kind: input, shape index: {}]
  %s12 = inlined_call_operand.vmem [shape: f32[1,128], index: 12, kind: input, shape index: {}]
  %s13 = inlined_call_operand.hbm [shape: bf16[128,256], index: 13, kind: input, shape index: {}]
  %s14 = inlined_call_operand.vmem [shape: f32[1,256], index: 14, kind: input, shape index: {}]
  %s15 = inlined_call_operand.hbm [shape: bf16[256,128], index: 15, kind: input, shape index: {}]
  %s16 = inlined_call_operand.vmem [shape: f32[1,128], index: 16, kind: input, shape index: {}]
  %s17 = inlined_call_operand.hbm [shape: f32[2,16,128], index: 17, kind: output, shape index: {}]
  %s18 = sld [smem:[#allocation0]]
  $region129: #{tpu_custom_call.1} parent=0
    _
  %s20 = ssub.s32 1, %s18
  %s21 = scalar_select 0, %s20, %s18
  $region1: #{tpu_custom_call.1} parent=0
    #allocation3 [shape = 'u8[16384]{0}', space=vmem, size = 0x4000, scoped, tag = 'input window, operand 0']
    #allocation4 [shape = 's32[2]{0}', space=sflag, size = 0x8, scoped, tag = 'scoped memory for tpu_custom_call.1']
    #allocation5 [shape = 's32[2]{0}', space=sflag, size = 0x8, scoped, tag = 'scoped memory for tpu_custom_call.1']
    #allocation6 [shape = 'u8[32768]{0}', space=vmem, size = 0x8000, scoped, tag = 'input window, operand 3, single buffered']
    #allocation7 [shape = 's32[1]{0}', space=sflag, size = 0x4, scoped, tag = 'scoped memory for tpu_custom_call.1']
    #allocation8 [shape = 'u8[32768]{0}', space=vmem, size = 0x8000, scoped, tag = 'input window, operand 5, single buffered']
    #allocation9 [shape = 'u8[32768]{0}', space=vmem, size = 0x8000, scoped, tag = 'input window, operand 7, single buffered']
    #allocation10 [shape = 's32[1]{0}', space=sflag, size = 0x4, scoped, tag = 'scoped memory for tpu_custom_call.1']
    #allocation11 [shape = 'u8[32768]{0}', space=vmem, size = 0x8000, scoped, tag = 'input window, operand 9, single buffered']
    #allocation12 [shape = 'u8[65536]{0}', space=vmem, size = 0x10000, scoped, tag = 'input window, operand 13, single buffered']
    #allocation13 [shape = 's32[1]{0}', space=sflag, size = 0x4, scoped, tag = 'scoped memory for tpu_custom_call.1']
    #allocation14 [shape = 'u8[65536]{0}', space=vmem, size = 0x10000, scoped, tag = 'input window, operand 15, single buffered']
    #allocation15 [shape = 'u8[16384]{0}', space=vmem, size = 0x4000, scoped, tag = 'output window, operand 0']
    %22 = vsyncpa [#allocation4], 0
    %s23 = scalar_lea.sflag [#allocation4], 1
    %24 = vsyncpa %s23, 0
    %25 = vsyncpa [#allocation7], 0
    %26 = vsyncpa [#allocation10], 0
    %27 = vsyncpa [#allocation13], 0
    %28 = vsyncpa [#allocation5], 0
    %s29 = scalar_lea.sflag [#allocation5], 1
    %30 = vsyncpa %s29, 0
    loop: start=0, step=1, limit=4
    $region2: #{tpu_custom_call.1} parent=1 // loop_pre_header
      _
    $region3: #{tpu_custom_call.1} parent=1 // loop_header
      %s32 = sphi 0, %s36
      %p33 = scmp.ge.s32.totalorder %s32, 4
      %s42 = sphi 0, %s44
      %s45 = sphi 0, %s42
      %s46 = sphi 0, %s45
      %s62 = sphi 0, %s46
      %s66 = sphi 0, %s66
      %s68 = sphi 0, %s66
      %s69 = sphi 0, %s68
      %s83 = sphi 0, %s69
      %s87 = sphi 0, %s87
      %s89 = sphi 0, %s87
      %s90 = sphi 0, %s89
      %s104 = sphi 0, %s90
      %s108 = sphi 0, %s108
      %s110 = sphi 0, %s108
      %s111 = sphi 0, %s110
      %s125 = sphi 0, %s111
      %s129 = sphi 0, %s129
      %s131 = sphi 0, %s129
      %s132 = sphi 0, %s131
      %s146 = sphi 0, %s132
      %s150 = sphi 0, %s150
      %s152 = sphi 0, %s150
      %s153 = sphi 0, %s152
      %s167 = sphi 0, %s153
      %s171 = sphi 0, %s171
      %s173 = sphi 0, %s171
      %s174 = sphi 0, %s173
      %s188 = sphi 0, %s174
      %s192 = sphi 0, %s192
      %s194 = sphi 0, %s192
      %s195 = sphi 0, %s194
      %s209 = sphi 0, %s195
      %s213 = sphi 0, %s213
      %s215 = sphi 0, %s213
      %s216 = sphi 0, %s215
      %s230 = sphi 0, %s216
      %s234 = sphi 0, %s234
      %s236 = sphi 0, %s234
      %s237 = sphi 0, %s236
      %s251 = sphi 0, %s237
      %s255 = sphi 0, %s255
      %s257 = sphi 0, %s255
      %s258 = sphi 0, %s257
      %s272 = sphi 0, %s258
      %s276 = sphi 0, %s276
      %s278 = sphi 0, %s276
      %s279 = sphi 0, %s278
      %s293 = sphi 0, %s279
      %s297 = sphi 0, %s297
      %s299 = sphi 0, %s297
      %s300 = sphi 0, %s299
      %s314 = sphi 0, %s300
      %s318 = sphi 0, %s318
      %s320 = sphi 0, %s318
      %s321 = sphi 0, %s320
      %s335 = sphi 0, %s321
      %s339 = sphi 0, %s339
      %s341 = sphi 0, %s339
      %s342 = sphi 0, %s341
      %s356 = sphi 0, %s342
      %s360 = sphi 0, %s360
      %s362 = sphi 0, %s360
      %s363 = sphi 0, %s362
      %s377 = sphi 0, %s363
      %s381 = sphi 0, %s381
      %s383 = sphi 0, %s381
      %s384 = sphi 0, %s383
      %s398 = sphi 0, %s384
      %s404 = sphi 0, %s406
      %s407 = sphi 0, %s404
      %s408 = sphi 0, %s407
      %s424 = sphi 0, %s408
    $region4: #{tpu_custom_call.1} parent=1 // loop_header_branch
      %35 = sbr.rel (%p33) target = $region8
    $region5: #{tpu_custom_call.1} parent=1 // loop_body
      %s37 = ssub.s32 %s32, 1
      %s38 = ssub.s32 %s32, 2
      %s39 = sadd.s32 %s32, 1
      %s40 = ssub.s32 %s32, %s39
      %p41 = scmp.eq.s32.totalorder %s40, 0
      %s43 = sadd.s32 %s42, 1
      %s44 = scalar_select %p41, %s42, %s43
      %p47 = pneg %p41
      %p48 = scmp.eq.s32.totalorder %s32, 1
      %p49 = por %p47, %p48
      %p50 = scmp.ne.s32.totalorder %s42, %s45
      %p51 = scmp.eq.s32.totalorder %s32, 0
      %p52 = por %p50, %p51
      %p53 = scmp.ne.s32.totalorder %s42, %s45
      %p54 = scmp.eq.s32.totalorder %s37, 1
      %p55 = por %p53, %p54
      %p56 = scmp.ne.s32.totalorder %s45, %s46
      %p57 = scmp.eq.s32.totalorder %s37, 0
      %p58 = por %p56, %p57
      %p59 = scmp.ne.s32.totalorder %s45, %s46
      %p60 = scmp.eq.s32.totalorder %s38, 1
      %p61 = por %p59, %p60
      %p63 = scmp.ne.s32.totalorder %s46, %s62
      %p64 = scmp.eq.s32.totalorder %s38, 0
      %p65 = por %p63, %p64
      %s67 = sadd.s32 %s66, 1
      %p70 = scmp.eq.s32.totalorder %s32, 1
      %p71 = scmp.ne.s32.totalorder %s66, %s68
      %p72 = scmp.eq.s32.totalorder %s32, 0
      %p73 = por %p71, %p72
      %p74 = scmp.ne.s32.totalorder %s66, %s68
      %p75 = scmp.eq.s32.totalorder %s37, 1
      %p76 = por %p74, %p75
      %p77 = scmp.ne.s32.totalorder %s68, %s69
      %p78 = scmp.eq.s32.totalorder %s37, 0
      %p79 = por %p77, %p78
      %p80 = scmp.ne.s32.totalorder %s68, %s69
      %p81 = scmp.eq.s32.totalorder %s38, 1
      %p82 = por %p80, %p81
      %p84 = scmp.ne.s32.totalorder %s69, %s83
      %p85 = scmp.eq.s32.totalorder %s38, 0
      %p86 = por %p84, %p85
      %s88 = sadd.s32 %s87, 1
      %p91 = scmp.eq.s32.totalorder %s32, 1
      %p92 = scmp.ne.s32.totalorder %s87, %s89
      %p93 = scmp.eq.s32.totalorder %s32, 0
      %p94 = por %p92, %p93
      %p95 = scmp.ne.s32.totalorder %s87, %s89
      %p96 = scmp.eq.s32.totalorder %s37, 1
      %p97 = por %p95, %p96
      %p98 = scmp.ne.s32.totalorder %s89, %s90
      %p99 = scmp.eq.s32.totalorder %s37, 0
      %p100 = por %p98, %p99
      %p101 = scmp.ne.s32.totalorder %s89, %s90
      %p102 = scmp.eq.s32.totalorder %s38, 1
      %p103 = por %p101, %p102
      %p105 = scmp.ne.s32.totalorder %s90, %s104
      %p106 = scmp.eq.s32.totalorder %s38, 0
      %p107 = por %p105, %p106
      %s109 = sadd.s32 %s108, 1
      %p112 = scmp.eq.s32.totalorder %s32, 1
      %p113 = scmp.ne.s32.totalorder %s108, %s110
      %p114 = scmp.eq.s32.totalorder %s32, 0
      %p115 = por %p113, %p114
      %p116 = scmp.ne.s32.totalorder %s108, %s110
      %p117 = scmp.eq.s32.totalorder %s37, 1
      %p118 = por %p116, %p117
      %p119 = scmp.ne.s32.totalorder %s110, %s111
      %p120 = scmp.eq.s32.totalorder %s37, 0
      %p121 = por %p119, %p120
      %p122 = scmp.ne.s32.totalorder %s110, %s111
      %p123 = scmp.eq.s32.totalorder %s38, 1
      %p124 = por %p122, %p123
      %p126 = scmp.ne.s32.totalorder %s111, %s125
      %p127 = scmp.eq.s32.totalorder %s38, 0
      %p128 = por %p126, %p127
      %s130 = sadd.s32 %s129, 1
      %p133 = scmp.eq.s32.totalorder %s32, 1
      %p134 = scmp.ne.s32.totalorder %s129, %s131
      %p135 = scmp.eq.s32.totalorder %s32, 0
      %p136 = por %p134, %p135
      %p137 = scmp.ne.s32.totalorder %s129, %s131
      %p138 = scmp.eq.s32.totalorder %s37, 1
      %p139 = por %p137, %p138
      %p140 = scmp.ne.s32.totalorder %s131, %s132
      %p141 = scmp.eq.s32.totalorder %s37, 0
      %p142 = por %p140, %p141
      %p143 = scmp.ne.s32.totalorder %s131, %s132
      %p144 = scmp.eq.s32.totalorder %s38, 1
      %p145 = por %p143, %p144
      %p147 = scmp.ne.s32.totalorder %s132, %s146
      %p148 = scmp.eq.s32.totalorder %s38, 0
      %p149 = por %p147, %p148
      %s151 = sadd.s32 %s150, 1
      %p154 = scmp.eq.s32.totalorder %s32, 1
      %p155 = scmp.ne.s32.totalorder %s150, %s152
      %p156 = scmp.eq.s32.totalorder %s32, 0
      %p157 = por %p155, %p156
      %p158 = scmp.ne.s32.totalorder %s150, %s152
      %p159 = scmp.eq.s32.totalorder %s37, 1
      %p160 = por %p158, %p159
      %p161 = scmp.ne.s32.totalorder %s152, %s153
      %p162 = scmp.eq.s32.totalorder %s37, 0
      %p163 = por %p161, %p162
      %p164 = scmp.ne.s32.totalorder %s152, %s153
      %p165 = scmp.eq.s32.totalorder %s38, 1
      %p166 = por %p164, %p165
      %p168 = scmp.ne.s32.totalorder %s153, %s167
      %p169 = scmp.eq.s32.totalorder %s38, 0
      %p170 = por %p168, %p169
      %s172 = sadd.s32 %s171, 1
      %p175 = scmp.eq.s32.totalorder %s32, 1
      %p176 = scmp.ne.s32.totalorder %s171, %s173
      %p177 = scmp.eq.s32.totalorder %s32, 0
      %p178 = por %p176, %p177
      %p179 = scmp.ne.s32.totalorder %s171, %s173
      %p180 = scmp.eq.s32.totalorder %s37, 1
      %p181 = por %p179, %p180
      %p182 = scmp.ne.s32.totalorder %s173, %s174
      %p183 = scmp.eq.s32.totalorder %s37, 0
      %p184 = por %p182, %p183
      %p185 = scmp.ne.s32.totalorder %s173, %s174
      %p186 = scmp.eq.s32.totalorder %s38, 1
      %p187 = por %p185, %p186
      %p189 = scmp.ne.s32.totalorder %s174, %s188
      %p190 = scmp.eq.s32.totalorder %s38, 0
      %p191 = por %p189, %p190
      %s193 = sadd.s32 %s192, 1
      %p196 = scmp.eq.s32.totalorder %s32, 1
      %p197 = scmp.ne.s32.totalorder %s192, %s194
      %p198 = scmp.eq.s32.totalorder %s32, 0
      %p199 = por %p197, %p198
      %p200 = scmp.ne.s32.totalorder %s192, %s194
      %p201 = scmp.eq.s32.totalorder %s37, 1
      %p202 = por %p200, %p201
      %p203 = scmp.ne.s32.totalorder %s194, %s195
      %p204 = scmp.eq.s32.totalorder %s37, 0
      %p205 = por %p203, %p204
      %p206 = scmp.ne.s32.totalorder %s194, %s195
      %p207 = scmp.eq.s32.totalorder %s38, 1
      %p208 = por %p206, %p207
      %p210 = scmp.ne.s32.totalorder %s195, %s209
      %p211 = scmp.eq.s32.totalorder %s38, 0
      %p212 = por %p210, %p211
      %s214 = sadd.s32 %s213, 1
      %p217 = scmp.eq.s32.totalorder %s32, 1
      %p218 = scmp.ne.s32.totalorder %s213, %s215
      %p219 = scmp.eq.s32.totalorder %s32, 0
      %p220 = por %p218, %p219
      %p221 = scmp.ne.s32.totalorder %s213, %s215
      %p222 = scmp.eq.s32.totalorder %s37, 1
      %p223 = por %p221, %p222
      %p224 = scmp.ne.s32.totalorder %s215, %s216
      %p225 = scmp.eq.s32.totalorder %s37, 0
      %p226 = por %p224, %p225
      %p227 = scmp.ne.s32.totalorder %s215, %s216
      %p228 = scmp.eq.s32.totalorder %s38, 1
      %p229 = por %p227, %p228
      %p231 = scmp.ne.s32.totalorder %s216, %s230
      %p232 = scmp.eq.s32.totalorder %s38, 0
      %p233 = por %p231, %p232
      %s235 = sadd.s32 %s234, 1
      %p238 = scmp.eq.s32.totalorder %s32, 1
      %p239 = scmp.ne.s32.totalorder %s234, %s236
      %p240 = scmp.eq.s32.totalorder %s32, 0
      %p241 = por %p239, %p240
      %p242 = scmp.ne.s32.totalorder %s234, %s236
      %p243 = scmp.eq.s32.totalorder %s37, 1
      %p244 = por %p242, %p243
      %p245 = scmp.ne.s32.totalorder %s236, %s237
      %p246 = scmp.eq.s32.totalorder %s37, 0
      %p247 = por %p245, %p246
      %p248 = scmp.ne.s32.totalorder %s236, %s237
      %p249 = scmp.eq.s32.totalorder %s38, 1
      %p250 = por %p248, %p249
      %p252 = scmp.ne.s32.totalorder %s237, %s251
      %p253 = scmp.eq.s32.totalorder %s38, 0
      %p254 = por %p252, %p253
      %s256 = sadd.s32 %s255, 1
      %p259 = scmp.eq.s32.totalorder %s32, 1
      %p260 = scmp.ne.s32.totalorder %s255, %s257
      %p261 = scmp.eq.s32.totalorder %s32, 0
      %p262 = por %p260, %p261
      %p263 = scmp.ne.s32.totalorder %s255, %s257
      %p264 = scmp.eq.s32.totalorder %s37, 1
      %p265 = por %p263, %p264
      %p266 = scmp.ne.s32.totalorder %s257, %s258
      %p267 = scmp.eq.s32.totalorder %s37, 0
      %p268 = por %p266, %p267
      %p269 = scmp.ne.s32.totalorder %s257, %s258
      %p270 = scmp.eq.s32.totalorder %s38, 1
      %p271 = por %p269, %p270
      %p273 = scmp.ne.s32.totalorder %s258, %s272
      %p274 = scmp.eq.s32.totalorder %s38, 0
      %p275 = por %p273, %p274
      %s277 = sadd.s32 %s276, 1
      %p280 = scmp.eq.s32.totalorder %s32, 1
      %p281 = scmp.ne.s32.totalorder %s276, %s278
      %p282 = scmp.eq.s32.totalorder %s32, 0
      %p283 = por %p281, %p282
      %p284 = scmp.ne.s32.totalorder %s276, %s278
      %p285 = scmp.eq.s32.totalorder %s37, 1
      %p286 = por %p284, %p285
      %p287 = scmp.ne.s32.totalorder %s278, %s279
      %p288 = scmp.eq.s32.totalorder %s37, 0
      %p289 = por %p287, %p288
      %p290 = scmp.ne.s32.totalorder %s278, %s279
      %p291 = scmp.eq.s32.totalorder %s38, 1
      %p292 = por %p290, %p291
      %p294 = scmp.ne.s32.totalorder %s279, %s293
      %p295 = scmp.eq.s32.totalorder %s38, 0
      %p296 = por %p294, %p295
      %s298 = sadd.s32 %s297, 1
      %p301 = scmp.eq.s32.totalorder %s32, 1
      %p302 = scmp.ne.s32.totalorder %s297, %s299
      %p303 = scmp.eq.s32.totalorder %s32, 0
      %p304 = por %p302, %p303
      %p305 = scmp.ne.s32.totalorder %s297, %s299
      %p306 = scmp.eq.s32.totalorder %s37, 1
      %p307 = por %p305, %p306
      %p308 = scmp.ne.s32.totalorder %s299, %s300
      %p309 = scmp.eq.s32.totalorder %s37, 0
      %p310 = por %p308, %p309
      %p311 = scmp.ne.s32.totalorder %s299, %s300
      %p312 = scmp.eq.s32.totalorder %s38, 1
      %p313 = por %p311, %p312
      %p315 = scmp.ne.s32.totalorder %s300, %s314
      %p316 = scmp.eq.s32.totalorder %s38, 0
      %p317 = por %p315, %p316
      %s319 = sadd.s32 %s318, 1
      %p322 = scmp.eq.s32.totalorder %s32, 1
      %p323 = scmp.ne.s32.totalorder %s318, %s320
      %p324 = scmp.eq.s32.totalorder %s32, 0
      %p325 = por %p323, %p324
      %p326 = scmp.ne.s32.totalorder %s318, %s320
      %p327 = scmp.eq.s32.totalorder %s37, 1
      %p328 = por %p326, %p327
      %p329 = scmp.ne.s32.totalorder %s320, %s321
      %p330 = scmp.eq.s32.totalorder %s37, 0
      %p331 = por %p329, %p330
      %p332 = scmp.ne.s32.totalorder %s320, %s321
      %p333 = scmp.eq.s32.totalorder %s38, 1
      %p334 = por %p332, %p333
      %p336 = scmp.ne.s32.totalorder %s321, %s335
      %p337 = scmp.eq.s32.totalorder %s38, 0
      %p338 = por %p336, %p337
      %s340 = sadd.s32 %s339, 1
      %p343 = scmp.eq.s32.totalorder %s32, 1
      %p344 = scmp.ne.s32.totalorder %s339, %s341
      %p345 = scmp.eq.s32.totalorder %s32, 0
      %p346 = por %p344, %p345
      %p347 = scmp.ne.s32.totalorder %s339, %s341
      %p348 = scmp.eq.s32.totalorder %s37, 1
      %p349 = por %p347, %p348
      %p350 = scmp.ne.s32.totalorder %s341, %s342
      %p351 = scmp.eq.s32.totalorder %s37, 0
      %p352 = por %p350, %p351
      %p353 = scmp.ne.s32.totalorder %s341, %s342
      %p354 = scmp.eq.s32.totalorder %s38, 1
      %p355 = por %p353, %p354
      %p357 = scmp.ne.s32.totalorder %s342, %s356
      %p358 = scmp.eq.s32.totalorder %s38, 0
      %p359 = por %p357, %p358
      %s361 = sadd.s32 %s360, 1
      %p364 = scmp.eq.s32.totalorder %s32, 1
      %p365 = scmp.ne.s32.totalorder %s360, %s362
      %p366 = scmp.eq.s32.totalorder %s32, 0
      %p367 = por %p365, %p366
      %p368 = scmp.ne.s32.totalorder %s360, %s362
      %p369 = scmp.eq.s32.totalorder %s37, 1
      %p370 = por %p368, %p369
      %p371 = scmp.ne.s32.totalorder %s362, %s363
      %p372 = scmp.eq.s32.totalorder %s37, 0
      %p373 = por %p371, %p372
      %p374 = scmp.ne.s32.totalorder %s362, %s363
      %p375 = scmp.eq.s32.totalorder %s38, 1
      %p376 = por %p374, %p375
      %p378 = scmp.ne.s32.totalorder %s363, %s377
      %p379 = scmp.eq.s32.totalorder %s38, 0
      %p380 = por %p378, %p379
      %s382 = sadd.s32 %s381, 1
      %p385 = scmp.eq.s32.totalorder %s32, 1
      %p386 = scmp.ne.s32.totalorder %s381, %s383
      %p387 = scmp.eq.s32.totalorder %s32, 0
      %p388 = por %p386, %p387
      %p389 = scmp.ne.s32.totalorder %s381, %s383
      %p390 = scmp.eq.s32.totalorder %s37, 1
      %p391 = por %p389, %p390
      %p392 = scmp.ne.s32.totalorder %s383, %s384
      %p393 = scmp.eq.s32.totalorder %s37, 0
      %p394 = por %p392, %p393
      %p395 = scmp.ne.s32.totalorder %s383, %s384
      %p396 = scmp.eq.s32.totalorder %s38, 1
      %p397 = por %p395, %p396
      %p399 = scmp.ne.s32.totalorder %s384, %s398
      %p400 = scmp.eq.s32.totalorder %s38, 0
      %p401 = por %p399, %p400
      %s402 = ssub.s32 %s32, %s39
      %p403 = scmp.eq.s32.totalorder %s402, 0
      %s405 = sadd.s32 %s404, 1
      %s406 = scalar_select %p403, %s404, %s405
      %p409 = pneg %p403
      %p410 = scmp.eq.s32.totalorder %s32, 1
      %p411 = por %p409, %p410
      %p412 = scmp.ne.s32.totalorder %s404, %s407
      %p413 = scmp.eq.s32.totalorder %s32, 0
      %p414 = por %p412, %p413
      %p415 = scmp.ne.s32.totalorder %s404, %s407
      %p416 = scmp.eq.s32.totalorder %s37, 1
      %p417 = por %p415, %p416
      %p418 = scmp.ne.s32.totalorder %s407, %s408
      %p419 = scmp.eq.s32.totalorder %s37, 0
      %p420 = por %p418, %p419
      %p421 = scmp.ne.s32.totalorder %s407, %s408
      %p422 = scmp.eq.s32.totalorder %s38, 1
      %p423 = por %p421, %p422
      %p425 = scmp.ne.s32.totalorder %s408, %s424
      %p426 = scmp.eq.s32.totalorder %s38, 0
      %p427 = por %p425, %p426
      %p428 = scmp.le.s32.totalorder 1, %s32
      %p429 = scmp.lt.s32.totalorder %s32, 3
      %p430 = pnand %p428, %p429
      %p431 = pneg %p430
      // Predicated region
      $region9: #{tpu_custom_call.1} parent=5 // pred_check
        _
      $region10: #{tpu_custom_call.1} parent=5 // pred_check_branch
        %433 = sbr.rel (%p430) target = $region12
      $region11: #{tpu_custom_call.1} parent=5 // pred_region
        %s434 = ssub.s32 %s32, 1
        // Predicated region
        $region13: #{tpu_custom_call.1} parent=11 // pred_check
          %p435 = pneg %p79
        $region14: #{tpu_custom_call.1} parent=11 // pred_check_branch
          %437 = sbr.rel (%p435) target = $region16
        $region15: #{tpu_custom_call.1} parent=11 // pred_region
          _
        $region16: #{tpu_custom_call.1} parent=11 // pred_fallthru
          _
        // Predicated region
        $region17: #{tpu_custom_call.1} parent=11 // pred_check
          %p438 = pneg %p100
        $region18: #{tpu_custom_call.1} parent=11 // pred_check_branch
          %440 = sbr.rel (%p438) target = $region20
        $region19: #{tpu_custom_call.1} parent=11 // pred_region
          _
        $region20: #{tpu_custom_call.1} parent=11 // pred_fallthru
          _
        // Predicated region
        $region21: #{tpu_custom_call.1} parent=11 // pred_check
          %p441 = pneg %p121
        $region22: #{tpu_custom_call.1} parent=11 // pred_check_branch
          %443 = sbr.rel (%p441) target = $region24
        $region23: #{tpu_custom_call.1} parent=11 // pred_region
          %s445 = ssub.s32 1024, 1024
          %446 = vsyncadd [#allocation7], %s445
          %s447 = sshll.u32 [#allocation6], 4
          %s448 = int_to_ptr.vmem [resolvable:$true] %s447
          %453 = dma.hbm_to_vmem [thread:$0]  %s3, 1024, %s448, [#allocation7], 64, 64, 4
        $region24: #{tpu_custom_call.1} parent=11 // pred_fallthru
          _
        // Predicated region
        $region25: #{tpu_custom_call.1} parent=11 // pred_check
          %p454 = pneg %p142
        $region26: #{tpu_custom_call.1} parent=11 // pred_check_branch
          %456 = sbr.rel (%p454) target = $region28
        $region27: #{tpu_custom_call.1} parent=11 // pred_region
          _
        $region28: #{tpu_custom_call.1} parent=11 // pred_fallthru
          _
        // Predicated region
        $region29: #{tpu_custom_call.1} parent=11 // pred_check
          %p457 = pneg %p163
        $region30: #{tpu_custom_call.1} parent=11 // pred_check_branch
          %459 = sbr.rel (%p457) target = $region32
        $region31: #{tpu_custom_call.1} parent=11 // pred_region
          %s461 = ssub.s32 1024, 1024
          %462 = vsyncadd [#allocation7], %s461
          %s463 = sshll.u32 [#allocation8], 4
          %s464 = int_to_ptr.vmem [resolvable:$true] %s463
          %469 = dma.hbm_to_vmem [thread:$0]  %s5, 1024, %s464, [#allocation7], 64, 64, 4
        $region32: #{tpu_custom_call.1} parent=11 // pred_fallthru
          _
        // Predicated region
        $region33: #{tpu_custom_call.1} parent=11 // pred_check
          %p470 = pneg %p184
        $region34: #{tpu_custom_call.1} parent=11 // pred_check_branch
          %472 = sbr.rel (%p470) target = $region36
        $region35: #{tpu_custom_call.1} parent=11 // pred_region
          _
        $region36: #{tpu_custom_call.1} parent=11 // pred_fallthru
          _
        // Predicated region
        $region37: #{tpu_custom_call.1} parent=11 // pred_check
          %p473 = pneg %p205
        $region38: #{tpu_custom_call.1} parent=11 // pred_check_branch
          %475 = sbr.rel (%p473) target = $region40
        $region39: #{tpu_custom_call.1} parent=11 // pred_region
          %s477 = ssub.s32 1024, 1024
          %478 = vsyncadd [#allocation10], %s477
          %s479 = sshll.u32 [#allocation9], 4
          %s480 = int_to_ptr.vmem [resolvable:$true] %s479
          %485 = dma.hbm_to_vmem [thread:$0]  %s7, 1024, %s480, [#allocation10], 64, 64, 4
        $region40: #{tpu_custom_call.1} parent=11 // pred_fallthru
          _
        // Predicated region
        $region41: #{tpu_custom_call.1} parent=11 // pred_check
          %p486 = pneg %p226
        $region42: #{tpu_custom_call.1} parent=11 // pred_check_branch
          %488 = sbr.rel (%p486) target = $region44
        $region43: #{tpu_custom_call.1} parent=11 // pred_region
          _
        $region44: #{tpu_custom_call.1} parent=11 // pred_fallthru
          _
        // Predicated region
        $region45: #{tpu_custom_call.1} parent=11 // pred_check
          %p489 = pneg %p247
        $region46: #{tpu_custom_call.1} parent=11 // pred_check_branch
          %491 = sbr.rel (%p489) target = $region48
        $region47: #{tpu_custom_call.1} parent=11 // pred_region
          %s493 = ssub.s32 1024, 1024
          %494 = vsyncadd [#allocation10], %s493
          %s495 = sshll.u32 [#allocation11], 4
          %s496 = int_to_ptr.vmem [resolvable:$true] %s495
          %501 = dma.hbm_to_vmem [thread:$0]  %s9, 1024, %s496, [#allocation10], 64, 64, 4
        $region48: #{tpu_custom_call.1} parent=11 // pred_fallthru
          _
        // Predicated region
        $region49: #{tpu_custom_call.1} parent=11 // pred_check
          %p502 = pneg %p268
        $region50: #{tpu_custom_call.1} parent=11 // pred_check_branch
          %504 = sbr.rel (%p502) target = $region52
        $region51: #{tpu_custom_call.1} parent=11 // pred_region
          _
        $region52: #{tpu_custom_call.1} parent=11 // pred_fallthru
          _
        // Predicated region
        $region53: #{tpu_custom_call.1} parent=11 // pred_check
          %p505 = pneg %p289
        $region54: #{tpu_custom_call.1} parent=11 // pred_check_branch
          %507 = sbr.rel (%p505) target = $region56
        $region55: #{tpu_custom_call.1} parent=11 // pred_region
          _
        $region56: #{tpu_custom_call.1} parent=11 // pred_fallthru
          _
        // Predicated region
        $region57: #{tpu_custom_call.1} parent=11 // pred_check
          %p508 = pneg %p310
        $region58: #{tpu_custom_call.1} parent=11 // pred_check_branch
          %510 = sbr.rel (%p508) target = $region60
        $region59: #{tpu_custom_call.1} parent=11 // pred_region
          _
        $region60: #{tpu_custom_call.1} parent=11 // pred_fallthru
          _
        // Predicated region
        $region61: #{tpu_custom_call.1} parent=11 // pred_check
          %p511 = pneg %p331
        $region62: #{tpu_custom_call.1} parent=11 // pred_check_branch
          %513 = sbr.rel (%p511) target = $region64
        $region63: #{tpu_custom_call.1} parent=11 // pred_region
          %s515 = ssub.s32 2048, 2048
          %516 = vsyncadd [#allocation13], %s515
          %s517 = sshll.u32 [#allocation12], 4
          %s518 = int_to_ptr.vmem [resolvable:$true] %s517
          %523 = dma.hbm_to_vmem [thread:$0]  %s13, 2048, %s518, [#allocation13], 128, 128, 8
        $region64: #{tpu_custom_call.1} parent=11 // pred_fallthru
          _
        // Predicated region
        $region65: #{tpu_custom_call.1} parent=11 // pred_check
          %p524 = pneg %p352
        $region66: #{tpu_custom_call.1} parent=11 // pred_check_branch
          %526 = sbr.rel (%p524) target = $region68
        $region67: #{tpu_custom_call.1} parent=11 // pred_region
          _
        $region68: #{tpu_custom_call.1} parent=11 // pred_fallthru
          _
        // Predicated region
        $region69: #{tpu_custom_call.1} parent=11 // pred_check
          %p527 = pneg %p373
        $region70: #{tpu_custom_call.1} parent=11 // pred_check_branch
          %529 = sbr.rel (%p527) target = $region72
        $region71: #{tpu_custom_call.1} parent=11 // pred_region
          %s531 = ssub.s32 2048, 2048
          %532 = vsyncadd [#allocation13], %s531
          %s533 = sshll.u32 [#allocation14], 4
          %s534 = int_to_ptr.vmem [resolvable:$true] %s533
          %539 = dma.hbm_to_vmem [thread:$0]  %s15, 2048, %s534, [#allocation13], 64, 64, 4
        $region72: #{tpu_custom_call.1} parent=11 // pred_fallthru
          _
        // Predicated region
        $region73: #{tpu_custom_call.1} parent=11 // pred_check
          %p540 = pneg %p394
        $region74: #{tpu_custom_call.1} parent=11 // pred_check_branch
          %542 = sbr.rel (%p540) target = $region76
        $region75: #{tpu_custom_call.1} parent=11 // pred_region
          _
        $region76: #{tpu_custom_call.1} parent=11 // pred_fallthru
          _
      $region12: #{tpu_custom_call.1} parent=5 // pred_fallthru
        _
      %p543 = scmp.lt.s32.totalorder %s32, 2
      // Predicated region
      $region77: #{tpu_custom_call.1} parent=5 // pred_check
        %p544 = pneg %p543
      $region78: #{tpu_custom_call.1} parent=5 // pred_check_branch
        %546 = sbr.rel (%p544) target = $region80
      $region79: #{tpu_custom_call.1} parent=5 // pred_region
        // Predicated region
        $region81: #{tpu_custom_call.1} parent=79 // pred_check
          %p547 = pneg %p52
        $region82: #{tpu_custom_call.1} parent=79 // pred_check_branch
          %549 = sbr.rel (%p547) target = $region84
        $region83: #{tpu_custom_call.1} parent=79 // pred_region
          %s550 = sand.u32 %s42, 1
          %s551 = scalar_lea.sflag [#allocation4], %s550
          %s552 = sand.u32 %s42, 1
          %s553 = smul.addr %s552, 16
          %s554 = scalar_lea.vmem [#allocation3], %s553
          %s556 = ssub.s32 256, 256
          %557 = vsyncadd %s551, %s556
          %s558 = smul.addr %s32, 2
          %s559 = smul.addr %s558, 128
          %s560 = scalar_lea.hbm %s0, %s559
          %s561 = sshll.u32 %s554, 4
          %s562 = int_to_ptr.vmem [resolvable:$true] %s561
          %567 = dma.hbm_to_vmem [thread:$0]  %s560, 256, %s562, %s551, 128, 128, 8
        $region84: #{tpu_custom_call.1} parent=79 // pred_fallthru
          _
      $region80: #{tpu_custom_call.1} parent=5 // pred_fallthru
        _
      %p568 = scmp.le.s32.totalorder 1, %s32
      %p569 = scmp.lt.s32.totalorder %s32, 3
      %p570 = pnand %p568, %p569
      %p571 = pneg %p570
      // Predicated region
      $region85: #{tpu_custom_call.1} parent=5 // pred_check
        _
      $region86: #{tpu_custom_call.1} parent=5 // pred_check_branch
        %573 = sbr.rel (%p570) target = $region88
      $region87: #{tpu_custom_call.1} parent=5 // pred_region
        %s574 = ssub.s32 %s32, 1
        %s575 = sand.u32 %s45, 1
        %s576 = scalar_lea.sflag [#allocation4], %s575
        %s577 = sand.u32 %s45, 1
        %s578 = smul.addr %s577, 16
        %s579 = scalar_lea.vmem [#allocation3], %s578
        // Predicated region
        $region89: #{tpu_custom_call.1} parent=87 // pred_check
          %p580 = pneg %p58
        $region90: #{tpu_custom_call.1} parent=87 // pred_check_branch
          %582 = sbr.rel (%p580) target = $region92
        $region91: #{tpu_custom_call.1} parent=87 // pred_region
          %583 = dma.done %s576, 256
        $region92: #{tpu_custom_call.1} parent=87 // pred_fallthru
          _
        // Predicated region
        $region93: #{tpu_custom_call.1} parent=87 // pred_check
          %p584 = pneg %p121
        $region94: #{tpu_custom_call.1} parent=87 // pred_check_branch
          %586 = sbr.rel (%p584) target = $region96
        $region95: #{tpu_custom_call.1} parent=87 // pred_region
          %587 = dma.done [#allocation7], 1024
        $region96: #{tpu_custom_call.1} parent=87 // pred_fallthru
          _
        // Predicated region
        $region97: #{tpu_custom_call.1} parent=87 // pred_check
          %p588 = pneg %p163
        $region98: #{tpu_custom_call.1} parent=87 // pred_check_branch
          %590 = sbr.rel (%p588) target = $region100
        $region99: #{tpu_custom_call.1} parent=87 // pred_region
          %591 = dma.done [#allocation7], 1024
        $region100: #{tpu_custom_call.1} parent=87 // pred_fallthru
          _
        // Predicated region
        $region101: #{tpu_custom_call.1} parent=87 // pred_check
          %p592 = pneg %p205
        $region102: #{tpu_custom_call.1} parent=87 // pred_check_branch
          %594 = sbr.rel (%p592) target = $region104
        $region103: #{tpu_custom_call.1} parent=87 // pred_region
          %595 = dma.done [#allocation10], 1024
        $region104: #{tpu_custom_call.1} parent=87 // pred_fallthru
          _
        // Predicated region
        $region105: #{tpu_custom_call.1} parent=87 // pred_check
          %p596 = pneg %p247
        $region106: #{tpu_custom_call.1} parent=87 // pred_check_branch
          %598 = sbr.rel (%p596) target = $region108
        $region107: #{tpu_custom_call.1} parent=87 // pred_region
          %599 = dma.done [#allocation10], 1024
        $region108: #{tpu_custom_call.1} parent=87 // pred_fallthru
          _
        // Predicated region
        $region109: #{tpu_custom_call.1} parent=87 // pred_check
          %p600 = pneg %p331
        $region110: #{tpu_custom_call.1} parent=87 // pred_check_branch
          %602 = sbr.rel (%p600) target = $region112
        $region111: #{tpu_custom_call.1} parent=87 // pred_region
          %603 = dma.done [#allocation13], 2048
        $region112: #{tpu_custom_call.1} parent=87 // pred_fallthru
          _
        // Predicated region
        $region113: #{tpu_custom_call.1} parent=87 // pred_check
          %p604 = pneg %p373
        $region114: #{tpu_custom_call.1} parent=87 // pred_check_branch
          %606 = sbr.rel (%p604) target = $region116
        $region115: #{tpu_custom_call.1} parent=87 // pred_region
          %607 = dma.done [#allocation13], 2048
        $region116: #{tpu_custom_call.1} parent=87 // pred_fallthru
          _
        %s608 = sand.u32 %s45, 1
        %s609 = scalar_lea.sflag [#allocation4], %s608
        %s610 = sand.u32 %s45, 1
        %s611 = smul.addr %s610, 16
        %s612 = scalar_lea.vmem [#allocation3], %s611
        %p613 = pneg %p58
        %p614 = pneg %p55
        %p615 = pneg %p79
        %p616 = pneg %p76
        %p617 = pneg %p100
        %p618 = pneg %p97
        %p619 = pneg %p121
        %p620 = pneg %p118
        %p621 = pneg %p142
        %p622 = pneg %p139
        %p623 = pneg %p163
        %p624 = pneg %p160
        %p625 = pneg %p184
        %p626 = pneg %p181
        %p627 = pneg %p205
        %p628 = pneg %p202
        %p629 = pneg %p226
        %p630 = pneg %p223
        %p631 = pneg %p247
        %p632 = pneg %p244
        %p633 = pneg %p268
        %p634 = pneg %p265
        %p635 = pneg %p289
        %p636 = pneg %p286
        %p637 = pneg %p310
        %p638 = pneg %p307
        %p639 = pneg %p331
        %p640 = pneg %p328
        %p641 = pneg %p352
        %p642 = pneg %p349
        %p643 = pneg %p373
        %p644 = pneg %p370
        %p645 = pneg %p394
        %p646 = pneg %p391
        %p647 = pneg %p420
        %p648 = pneg %p417
        %s649 = sand.u32 %s407, 1
        %s650 = scalar_lea.sflag [#allocation5], %s649
        %s651 = sand.u32 %s407, 1
        %s652 = smul.addr %s651, 16
        %s653 = scalar_lea.vmem [#allocation15], %s652
        %v655 = vld [vmem:[%s579] sm:$0xff]
        %v656 = vld [vmem:[%s579 + $0x8] sm:$0xff]
        %v657 = vld [vmem:[%s1] sm:$0x1]
        %v658 = vld [vmem:[%s2] sm:$0x1]
        %659 = vadd.xlane.f32.xlu0 %v655
        %v660 = vpop.xlane.xlu0 %659
        %661 = vadd.xlane.f32.xlu0 %v656
        %v662 = vpop.xlane.xlu0 %661
        %v663 = vrcp.pop 128.0
        %v664 = vmul.f32 %v660, %v663
        %v665 = vmul.f32 %v662, %v663
        %v666 = vsub.f32 %v655, %v664
        %v667 = vsub.f32 %v656, %v665
        %v668 = vmul.f32 %v666, %v666
        %v669 = vmul.f32 %v667, %v667
        %670 = vadd.xlane.f32.xlu0 %v668
        %v671 = vpop.xlane.xlu0 %670
        %672 = vadd.xlane.f32.xlu0 %v669
        %v673 = vpop.xlane.xlu0 %672
        %v674 = vmul.f32 %v671, %v663
        %v675 = vmul.f32 %v673, %v663
        %v676 = vadd.f32 %v674, 1e-05
        %v677 = vadd.f32 %v675, 1e-05
        %v678 = vrsqrt.pop %v676
        %v679 = vrsqrt.pop %v677
        %v680 = vmul.f32 %v666, %v678
        %v681 = vmul.f32 %v667, %v679
        %v683 = vlaneseq
        %v684 = vshrl.u32 %v683, 7
        %v685 = vsub.s32 0, %v684
        %v686 = vrot.slane %v657, %v685
        %v688 = vmul.f32 %v680, %v686
        %v689 = vmul.f32 %v681, %v686
        %v691 = vlaneseq
        %v692 = vshrl.u32 %v691, 7
        %v693 = vsub.s32 0, %v692
        %v694 = vrot.slane %v658, %v693
        %v696 = vadd.f32 %v688, %v694
        %v697 = vadd.f32 %v689, %v694
        %v698 = vpack.c.bf16 %v697, %v696
        %v699 = vld [vmem:[#allocation6] sm:$0xf]
        %v700 = vld [vmem:[#allocation6 + $0x4] sm:$0xf]
        %v701 = vld [vmem:[#allocation6 + $0x8] sm:$0xf]
        %v702 = vld [vmem:[#allocation6 + $0xc] sm:$0xf]
        %v703 = vld [vmem:[#allocation6 + $0x10] sm:$0xf]
        %v704 = vld [vmem:[#allocation6 + $0x14] sm:$0xf]
        %v705 = vld [vmem:[#allocation6 + $0x18] sm:$0xf]
        %v706 = vld [vmem:[#allocation6 + $0x1c] sm:$0xf]
        %v707 = vld [vmem:[#allocation6 + $0x20] sm:$0xf]
        %v708 = vld [vmem:[#allocation6 + $0x24] sm:$0xf]
        %v709 = vld [vmem:[#allocation6 + $0x28] sm:$0xf]
        %v710 = vld [vmem:[#allocation6 + $0x2c] sm:$0xf]
        %v711 = vld [vmem:[#allocation6 + $0x30] sm:$0xf]
        %v712 = vld [vmem:[#allocation6 + $0x34] sm:$0xf]
        %v713 = vld [vmem:[#allocation6 + $0x38] sm:$0xf]
        %v714 = vld [vmem:[#allocation6 + $0x3c] sm:$0xf]
        %v715 = vld [vmem:[%s4] sm:$0x1]
        %v717 = vlaneseq
        %v718 = vshrl.u32 %v717, 7
        %v719 = vsub.s32 0, %v718
        %v720 = vrot.slane %v715, %v719
        %v738 = vunpack.c.l.b16 %v699
        %v739 = vunpack.c.l.b16 %v700
        %v740 = vunpack.c.l.b16 %v701
        %v741 = vunpack.c.l.b16 %v702
        %v742 = vunpack.c.l.b16 %v703
        %v743 = vunpack.c.l.b16 %v704
        %v744 = vunpack.c.l.b16 %v705
        %v745 = vunpack.c.l.b16 %v706
        %v746 = vunpack.c.l.b16 %v707
        %v747 = vunpack.c.l.b16 %v708
        %v748 = vunpack.c.l.b16 %v709
        %v749 = vunpack.c.l.b16 %v710
        %v750 = vunpack.c.l.b16 %v711
        %v751 = vunpack.c.l.b16 %v712
        %v752 = vunpack.c.l.b16 %v713
        %v753 = vunpack.c.l.b16 %v714
        %v754 = vpack.c.b16 %v739, %v738
        %v755 = vpack.c.b16 %v741, %v740
        %v756 = vpack.c.b16 %v743, %v742
        %v757 = vpack.c.b16 %v745, %v744
        %v758 = vpack.c.b16 %v747, %v746
        %v759 = vpack.c.b16 %v749, %v748
        %v760 = vpack.c.b16 %v751, %v750
        %v761 = vpack.c.b16 %v753, %v752
        %770 = vmatprep.subr.bf16.mxu0 0
        %771 = vmatpush1.bf16.msra.mxu0 %v754
        %772 = vmatprep.subr.bf16.mxu0 0
        %773 = vmatpush1.bf16.msra.mxu0 %v755
        %774 = vmatprep.subr.bf16.mxu0 0
        %775 = vmatpush1.bf16.msra.mxu0 %v756
        %776 = vmatprep.subr.bf16.mxu0 0
        %777 = vmatpush1.bf16.msra.mxu0 %v757
        %778 = vmatprep.subr.bf16.mxu0 0
        %779 = vmatpush1.bf16.msra.mxu0 %v758
        %780 = vmatprep.subr.bf16.mxu0 0
        %781 = vmatpush1.bf16.msra.mxu0 %v759
        %782 = vmatprep.subr.bf16.mxu0 0
        %783 = vmatpush1.bf16.msra.mxu0 %v760
        %784 = vmatprep.subr.bf16.mxu0 0
        %785 = vmatpush1.bf16.msra.mxu0 %v761
        %786 = vmatprep.subr.bf16.mxu0 0
        %787 = vmatpush1.bf16.msra.mxu0 0
        %788 = vmatprep.subr.bf16.mxu0 0
        %789 = vmatpush1.bf16.msra.mxu0 0
        %790 = vmatprep.subr.bf16.mxu0 0
        %791 = vmatpush1.bf16.msra.mxu0 0
        %792 = vmatprep.subr.bf16.mxu0 0
        %793 = vmatpush1.bf16.msra.mxu0 0
        %794 = vmatprep.subr.bf16.mxu0 0
        %795 = vmatpush1.bf16.msra.mxu0 0
        %796 = vmatprep.subr.bf16.mxu0 0
        %797 = vmatpush1.bf16.msra.mxu0 0
        %798 = vmatprep.subr.bf16.mxu0 0
        %799 = vmatpush1.bf16.msra.mxu0 0
        %800 = vmatprep.subr.bf16.mxu0 0
        %801 = vmatpush1.bf16.msra.mxu0 0
        %802 = vmatprep.mubr.bf16.mxu0 0
        %803 = vmatmul.mubr.bf16.gmra.mrb[0].mxu0 %v698
        %v804 = vpop.f32.mrb[0].mxu0
        %v805 = vadd.f32 %v720, %v804
        %v806 = vpop.f32.mrb[0].mxu0
        %v807 = vpop.f32.mrb[0].mxu0
        %v808 = vadd.f32 %v720, %v807
        %v809 = vpop.f32.mrb[0].mxu0
        %810 = vdwg.mxu0
        %v811 = vld [vmem:[#allocation8] sm:$0xf]
        %v812 = vld [vmem:[#allocation8 + $0x4] sm:$0xf]
        %v813 = vld [vmem:[#allocation8 + $0x8] sm:$0xf]
        %v814 = vld [vmem:[#allocation8 + $0xc] sm:$0xf]
        %v815 = vld [vmem:[#allocation8 + $0x10] sm:$0xf]
        %v816 = vld [vmem:[#allocation8 + $0x14] sm:$0xf]
        %v817 = vld [vmem:[#allocation8 + $0x18] sm:$0xf]
        %v818 = vld [vmem:[#allocation8 + $0x1c] sm:$0xf]
        %v819 = vld [vmem:[#allocation8 + $0x20] sm:$0xf]
        %v820 = vld [vmem:[#allocation8 + $0x24] sm:$0xf]
        %v821 = vld [vmem:[#allocation8 + $0x28] sm:$0xf]
        %v822 = vld [vmem:[#allocation8 + $0x2c] sm:$0xf]
        %v823 = vld [vmem:[#allocation8 + $0x30] sm:$0xf]
        %v824 = vld [vmem:[#allocation8 + $0x34] sm:$0xf]
        %v825 = vld [vmem:[#allocation8 + $0x38] sm:$0xf]
        %v826 = vld [vmem:[#allocation8 + $0x3c] sm:$0xf]
        %v827 = vld [vmem:[%s6] sm:$0x1]
        %v829 = vlaneseq
        %v830 = vshrl.u32 %v829, 7
        %v831 = vsub.s32 0, %v830
        %v832 = vrot.slane %v827, %v831
        %v850 = vunpack.c.l.b16 %v811
        %v851 = vunpack.c.l.b16 %v812
        %v852 = vunpack.c.l.b16 %v813
        %v853 = vunpack.c.l.b16 %v814
        %v854 = vunpack.c.l.b16 %v815
        %v855 = vunpack.c.l.b16 %v816
        %v856 = vunpack.c.l.b16 %v817
        %v857 = vunpack.c.l.b16 %v818
        %v858 = vunpack.c.l.b16 %v819
        %v859 = vunpack.c.l.b16 %v820
        %v860 = vunpack.c.l.b16 %v821
        %v861 = vunpack.c.l.b16 %v822
        %v862 = vunpack.c.l.b16 %v823
        %v863 = vunpack.c.l.b16 %v824
        %v864 = vunpack.c.l.b16 %v825
        %v865 = vunpack.c.l.b16 %v826
        %v866 = vpack.c.b16 %v851, %v850
        %v867 = vpack.c.b16 %v853, %v852
        %v868 = vpack.c.b16 %v855, %v854
        %v869 = vpack.c.b16 %v857, %v856
        %v870 = vpack.c.b16 %v859, %v858
        %v871 = vpack.c.b16 %v861, %v860
        %v872 = vpack.c.b16 %v863, %v862
        %v873 = vpack.c.b16 %v865, %v864
        %882 = vmatprep.subr.bf16.mxu0 0
        %883 = vmatpush1.bf16.msra.mxu0 %v866
        %884 = vmatprep.subr.bf16.mxu0 0
        %885 = vmatpush1.bf16.msra.mxu0 %v867
        %886 = vmatprep.subr.bf16.mxu0 0
        %887 = vmatpush1.bf16.msra.mxu0 %v868
        %888 = vmatprep.subr.bf16.mxu0 0
        %889 = vmatpush1.bf16.msra.mxu0 %v869
        %890 = vmatprep.subr.bf16.mxu0 0
        %891 = vmatpush1.bf16.msra.mxu0 %v870
        %892 = vmatprep.subr.bf16.mxu0 0
        %893 = vmatpush1.bf16.msra.mxu0 %v871
        %894 = vmatprep.subr.bf16.mxu0 0
        %895 = vmatpush1.bf16.msra.mxu0 %v872
        %896 = vmatprep.subr.bf16.mxu0 0
        %897 = vmatpush1.bf16.msra.mxu0 %v873
        %898 = vmatprep.subr.bf16.mxu0 0
        %899 = vmatpush1.bf16.msra.mxu0 0
        %900 = vmatprep.subr.bf16.mxu0 0
        %901 = vmatpush1.bf16.msra.mxu0 0
        %902 = vmatprep.subr.bf16.mxu0 0
        %903 = vmatpush1.bf16.msra.mxu0 0
        %904 = vmatprep.subr.bf16.mxu0 0
        %905 = vmatpush1.bf16.msra.mxu0 0
        %906 = vmatprep.subr.bf16.mxu0 0
        %907 = vmatpush1.bf16.msra.mxu0 0
        %908 = vmatprep.subr.bf16.mxu0 0
        %909 = vmatpush1.bf16.msra.mxu0 0
        %910 = vmatprep.subr.bf16.mxu0 0
        %911 = vmatpush1.bf16.msra.mxu0 0
        %912 = vmatprep.subr.bf16.mxu0 0
        %913 = vmatpush1.bf16.msra.mxu0 0
        %914 = vmatprep.mubr.bf16.mxu0 0
        %915 = vmatmul.mubr.bf16.gmra.mrb[0].mxu0 %v698
        %v916 = vpop.f32.mrb[0].mxu0
        %v917 = vadd.f32 %v832, %v916
        %v918 = vpop.f32.mrb[0].mxu0
        %v919 = vpop.f32.mrb[0].mxu0
        %v920 = vadd.f32 %v832, %v919
        %v921 = vpop.f32.mrb[0].mxu0
        %922 = vdwg.mxu0
        %v923 = vld [vmem:[#allocation9] sm:$0xf]
        %v924 = vld [vmem:[#allocation9 + $0x4] sm:$0xf]
        %v925 = vld [vmem:[#allocation9 + $0x8] sm:$0xf]
        %v926 = vld [vmem:[#allocation9 + $0xc] sm:$0xf]
        %v927 = vld [vmem:[#allocation9 + $0x10] sm:$0xf]
        %v928 = vld [vmem:[#allocation9 + $0x14] sm:$0xf]
        %v929 = vld [vmem:[#allocation9 + $0x18] sm:$0xf]
        %v930 = vld [vmem:[#allocation9 + $0x1c] sm:$0xf]
        %v931 = vld [vmem:[#allocation9 + $0x20] sm:$0xf]
        %v932 = vld [vmem:[#allocation9 + $0x24] sm:$0xf]
        %v933 = vld [vmem:[#allocation9 + $0x28] sm:$0xf]
        %v934 = vld [vmem:[#allocation9 + $0x2c] sm:$0xf]
        %v935 = vld [vmem:[#allocation9 + $0x30] sm:$0xf]
        %v936 = vld [vmem:[#allocation9 + $0x34] sm:$0xf]
        %v937 = vld [vmem:[#allocation9 + $0x38] sm:$0xf]
        %v938 = vld [vmem:[#allocation9 + $0x3c] sm:$0xf]
        %v939 = vld [vmem:[%s8] sm:$0x1]
        %v941 = vlaneseq
        %v942 = vshrl.u32 %v941, 7
        %v943 = vsub.s32 0, %v942
        %v944 = vrot.slane %v939, %v943
        %v962 = vunpack.c.l.b16 %v923
        %v963 = vunpack.c.l.b16 %v924
        %v964 = vunpack.c.l.b16 %v925
        %v965 = vunpack.c.l.b16 %v926
        %v966 = vunpack.c.l.b16 %v927
        %v967 = vunpack.c.l.b16 %v928
        %v968 = vunpack.c.l.b16 %v929
        %v969 = vunpack.c.l.b16 %v930
        %v970 = vunpack.c.l.b16 %v931
        %v971 = vunpack.c.l.b16 %v932
        %v972 = vunpack.c.l.b16 %v933
        %v973 = vunpack.c.l.b16 %v934
        %v974 = vunpack.c.l.b16 %v935
        %v975 = vunpack.c.l.b16 %v936
        %v976 = vunpack.c.l.b16 %v937
        %v977 = vunpack.c.l.b16 %v938
        %v978 = vpack.c.b16 %v963, %v962
        %v979 = vpack.c.b16 %v965, %v964
        %v980 = vpack.c.b16 %v967, %v966
        %v981 = vpack.c.b16 %v969, %v968
        %v982 = vpack.c.b16 %v971, %v970
        %v983 = vpack.c.b16 %v973, %v972
        %v984 = vpack.c.b16 %v975, %v974
        %v985 = vpack.c.b16 %v977, %v976
        %994 = vmatprep.subr.bf16.mxu0 0
        %995 = vmatpush1.bf16.msra.mxu0 %v978
        %996 = vmatprep.subr.bf16.mxu0 0
        %997 = vmatpush1.bf16.msra.mxu0 %v979
        %998 = vmatprep.subr.bf16.mxu0 0
        %999 = vmatpush1.bf16.msra.mxu0 %v980
        %1000 = vmatprep.subr.bf16.mxu0 0
        %1001 = vmatpush1.bf16.msra.mxu0 %v981
        %1002 = vmatprep.subr.bf16.mxu0 0
        %1003 = vmatpush1.bf16.msra.mxu0 %v982
        %1004 = vmatprep.subr.bf16.mxu0 0
        %1005 = vmatpush1.bf16.msra.mxu0 %v983
        %1006 = vmatprep.subr.bf16.mxu0 0
        %1007 = vmatpush1.bf16.msra.mxu0 %v984
        %1008 = vmatprep.subr.bf16.mxu0 0
        %1009 = vmatpush1.bf16.msra.mxu0 %v985
        %1010 = vmatprep.subr.bf16.mxu0 0
        %1011 = vmatpush1.bf16.msra.mxu0 0
        %1012 = vmatprep.subr.bf16.mxu0 0
        %1013 = vmatpush1.bf16.msra.mxu0 0
        %1014 = vmatprep.subr.bf16.mxu0 0
        %1015 = vmatpush1.bf16.msra.mxu0 0
        %1016 = vmatprep.subr.bf16.mxu0 0
        %1017 = vmatpush1.bf16.msra.mxu0 0
        %1018 = vmatprep.subr.bf16.mxu0 0
        %1019 = vmatpush1.bf16.msra.mxu0 0
        %1020 = vmatprep.subr.bf16.mxu0 0
        %1021 = vmatpush1.bf16.msra.mxu0 0
        %1022 = vmatprep.subr.bf16.mxu0 0
        %1023 = vmatpush1.bf16.msra.mxu0 0
        %1024 = vmatprep.subr.bf16.mxu0 0
        %1025 = vmatpush1.bf16.msra.mxu0 0
        %1026 = vmatprep.mubr.bf16.mxu0 0
        %1027 = vmatmul.mubr.bf16.gmra.mrb[0].mxu0 %v698
        %v1028 = vpop.f32.mrb[0].mxu0
        %v1029 = vadd.f32 %v944, %v1028
        %v1030 = vpop.f32.mrb[0].mxu0
        %v1031 = vpop.f32.mrb[0].mxu0
        %v1032 = vadd.f32 %v944, %v1031
        %v1033 = vpop.f32.mrb[0].mxu0
        %1034 = vdwg.mxu0
        %v1035 = vmul.f32 %v805, 0.17677669
        %v1036 = vmul.f32 %v808, 0.17677669
        %v1037 = vpack.c.bf16 %v1036, %v1035
        %v1038 = vpack.c.bf16 %v920, %v917
        %v1039 = vpack.c.bf16 %v1032, %v1029
        %vm1040 = vcmask 261120
        %v1042 = vsel %vm1040, %v1037, 0
        %v1045 = vsel %vm1040, %v1038, 0
        %1047 = vmatprep.subr.bf16.mxu0 0
        %1048 = vmatpush1.bf16.xpose.msra.mxu0 %v1045
        %1049 = vmatprep.subr.bf16.mxu0 0
        %1050 = vmatpush1.bf16.xpose.msra.mxu0 0
        %1051 = vmatprep.subr.bf16.mxu0 0
        %1052 = vmatpush1.bf16.xpose.msra.mxu0 0
        %1053 = vmatprep.subr.bf16.mxu0 0
        %1054 = vmatpush1.bf16.xpose.msra.mxu0 0
        %1055 = vmatprep.subr.bf16.mxu0 0
        %1056 = vmatpush1.bf16.xpose.msra.mxu0 0
        %1057 = vmatprep.subr.bf16.mxu0 0
        %1058 = vmatpush1.bf16.xpose.msra.mxu0 0
        %1059 = vmatprep.subr.bf16.mxu0 0
        %1060 = vmatpush1.bf16.xpose.msra.mxu0 0
        %1061 = vmatprep.subr.bf16.mxu0 0
        %1062 = vmatpush1.bf16.xpose.msra.mxu0 0
        %1063 = vmatprep.subr.bf16.mxu0 0
        %1064 = vmatpush1.bf16.xpose.msra.mxu0 0
        %1065 = vmatprep.subr.bf16.mxu0 0
        %1066 = vmatpush1.bf16.xpose.msra.mxu0 0
        %1067 = vmatprep.subr.bf16.mxu0 0
        %1068 = vmatpush1.bf16.xpose.msra.mxu0 0
        %1069 = vmatprep.subr.bf16.mxu0 0
        %1070 = vmatpush1.bf16.xpose.msra.mxu0 0
        %1071 = vmatprep.subr.bf16.mxu0 0
        %1072 = vmatpush1.bf16.xpose.msra.mxu0 0
        %1073 = vmatprep.subr.bf16.mxu0 0
        %1074 = vmatpush1.bf16.xpose.msra.mxu0 0
        %1075 = vmatprep.subr.bf16.mxu0 0
        %1076 = vmatpush1.bf16.xpose.msra.mxu0 0
        %1077 = vmatprep.subr.bf16.mxu0 0
        %1078 = vmatpush1.bf16.xpose.msra.mxu0 0
        %1079 = vmatprep.mubr.bf16.mxu0 0
        %1080 = vmatmul.mubr.bf16.gmra.mrb[0].mxu0 %v1042
        %v1081 = vpop.f32.mrb[0].mxu0
        %v1082 = vadd.f32 0.0, %v1081
        %v1083 = vpop.f32.mrb[0].mxu0
        %v1084 = vpop.f32.mrb[0].mxu0
        %v1085 = vadd.f32 0.0, %v1084
        %v1086 = vpop.f32.mrb[0].mxu0
        %1087 = vdwg.mxu0
        %vm1088 = vcmask 130048
        %v1089 = vsel %vm1088, %v1082, -inf
        %1090 = vmax.xlane.f32.xlu0 %v1089
        %v1091 = vpop.xlane.xlu0 %1090
        %v1092 = vsel %vm1088, %v1085, -inf
        %1093 = vmax.xlane.f32.xlu0 %v1092
        %v1094 = vpop.xlane.xlu0 %1093
        %v1095 = vsub.f32 %v1082, %v1091
        %v1096 = vsub.f32 %v1085, %v1094
        %v1097 = vmul.f32 %v1095, 1.442695
        %v1098 = vpow.pop %v1097
        %v1099 = vmul.f32 %v1096, 1.442695
        %v1100 = vpow.pop %v1099
        %v1101 = vsel %vm1088, %v1098, 0.0
        %1102 = vadd.xlane.f32.xlu0 %v1101
        %v1103 = vpop.xlane.xlu0 %1102
        %v1104 = vsel %vm1088, %v1100, 0.0
        %1105 = vadd.xlane.f32.xlu0 %v1104
        %v1106 = vpop.xlane.xlu0 %1105
        %v1107 = vrcp.pop %v1103
        %v1108 = vrcp.pop %v1106
        %v1109 = vmul.f32 %v1098, %v1107
        %v1110 = vmul.f32 %v1100, %v1108
        %v1111 = vpack.c.bf16 %v1110, %v1109
        %v1113 = vsel %vm1088, %v1111, 0
        %1115 = vmatprep.subr.bf16.mxu0 0
        %1116 = vmatpush1.bf16.msra.mxu0 %v1039
        %1117 = vmatprep.subr.bf16.mxu0 0
        %1118 = vmatpush1.bf16.msra.mxu0 0
        %1119 = vmatprep.subr.bf16.mxu0 0
        %1120 = vmatpush1.bf16.msra.mxu0 0
        %1121 = vmatprep.subr.bf16.mxu0 0
        %1122 = vmatpush1.bf16.msra.mxu0 0
        %1123 = vmatprep.subr.bf16.mxu0 0
        %1124 = vmatpush1.bf16.msra.mxu0 0
        %1125 = vmatprep.subr.bf16.mxu0 0
        %1126 = vmatpush1.bf16.msra.mxu0 0
        %1127 = vmatprep.subr.bf16.mxu0 0
        %1128 = vmatpush1.bf16.msra.mxu0 0
        %1129 = vmatprep.subr.bf16.mxu0 0
        %1130 = vmatpush1.bf16.msra.mxu0 0
        %1131 = vmatprep.subr.bf16.mxu0 0
        %1132 = vmatpush1.bf16.msra.mxu0 0
        %1133 = vmatprep.subr.bf16.mxu0 0
        %1134 = vmatpush1.bf16.msra.mxu0 0
        %1135 = vmatprep.subr.bf16.mxu0 0
        %1136 = vmatpush1.bf16.msra.mxu0 0
        %1137 = vmatprep.subr.bf16.mxu0 0
        %1138 = vmatpush1.bf16.msra.mxu0 0
        %1139 = vmatprep.subr.bf16.mxu0 0
        %1140 = vmatpush1.bf16.msra.mxu0 0
        %1141 = vmatprep.subr.bf16.mxu0 0
        %1142 = vmatpush1.bf16.msra.mxu0 0
        %1143 = vmatprep.subr.bf16.mxu0 0
        %1144 = vmatpush1.bf16.msra.mxu0 0
        %1145 = vmatprep.subr.bf16.mxu0 0
        %1146 = vmatpush1.bf16.msra.mxu0 0
        %1147 = vmatprep.mubr.bf16.mxu0 0
        %1148 = vmatmul.mubr.bf16.gmra.mrb[0].mxu0 %v1113
        %v1149 = vpop.f32.mrb[0].mxu0
        %v1150 = vadd.f32 0.0, %v1149
        %v1151 = vpop.f32.mrb[0].mxu0
        %v1152 = vpop.f32.mrb[0].mxu0
        %v1153 = vadd.f32 0.0, %v1152
        %v1154 = vpop.f32.mrb[0].mxu0
        %1155 = vdwg.mxu0
        %1156 = vst.msk [vmem:[#allocation2] sm:$0xff] %vm1040, %v1150
        %1157 = vst.msk [vmem:[#allocation2 + $0x8] sm:$0xff] %vm1040, %v1153
        %1159 = vrot.lane.b32.xlu0 %v1037, 96
        %v1160 = vpop.permute.xlu0 %1159
        %1162 = vrot.lane.b32.xlu0 %v1038, 96
        %v1163 = vpop.permute.xlu0 %1162
        %v1165 = vsel %vm1040, %v1160, 0
        %v1168 = vsel %vm1040, %v1163, 0
        %1170 = vmatprep.subr.bf16.mxu0 0
        %1171 = vmatpush1.bf16.xpose.msra.mxu0 %v1168
        %1172 = vmatprep.subr.bf16.mxu0 0
        %1173 = vmatpush1.bf16.xpose.msra.mxu0 0
        %1174 = vmatprep.subr.bf16.mxu0 0
        %1175 = vmatpush1.bf16.xpose.msra.mxu0 0
        %1176 = vmatprep.subr.bf16.mxu0 0
        %1177 = vmatpush1.bf16.xpose.msra.mxu0 0
        %1178 = vmatprep.subr.bf16.mxu0 0
        %1179 = vmatpush1.bf16.xpose.msra.mxu0 0
        %1180 = vmatprep.subr.bf16.mxu0 0
        %1181 = vmatpush1.bf16.xpose.msra.mxu0 0
        %1182 = vmatprep.subr.bf16.mxu0 0
        %1183 = vmatpush1.bf16.xpose.msra.mxu0 0
        %1184 = vmatprep.subr.bf16.mxu0 0
        %1185 = vmatpush1.bf16.xpose.msra.mxu0 0
        %1186 = vmatprep.subr.bf16.mxu0 0
        %1187 = vmatpush1.bf16.xpose.msra.mxu0 0
        %1188 = vmatprep.subr.bf16.mxu0 0
        %1189 = vmatpush1.bf16.xpose.msra.mxu0 0
        %1190 = vmatprep.subr.bf16.mxu0 0
        %1191 = vmatpush1.bf16.xpose.msra.mxu0 0
        %1192 = vmatprep.subr.bf16.mxu0 0
        %1193 = vmatpush1.bf16.xpose.msra.mxu0 0
        %1194 = vmatprep.subr.bf16.mxu0 0
        %1195 = vmatpush1.bf16.xpose.msra.mxu0 0
        %1196 = vmatprep.subr.bf16.mxu0 0
        %1197 = vmatpush1.bf16.xpose.msra.mxu0 0
        %1198 = vmatprep.subr.bf16.mxu0 0
        %1199 = vmatpush1.bf16.xpose.msra.mxu0 0
        %1200 = vmatprep.subr.bf16.mxu0 0
        %1201 = vmatpush1.bf16.xpose.msra.mxu0 0
        %1202 = vmatprep.mubr.bf16.mxu0 0
        %1203 = vmatmul.mubr.bf16.gmra.mrb[0].mxu0 %v1165
        %v1204 = vpop.f32.mrb[0].mxu0
        %v1205 = vadd.f32 0.0, %v1204
        %v1206 = vpop.f32.mrb[0].mxu0
        %v1207 = vpop.f32.mrb[0].mxu0
        %v1208 = vadd.f32 0.0, %v1207
        %v1209 = vpop.f32.mrb[0].mxu0
        %1210 = vdwg.mxu0
        %v1211 = vsel %vm1088, %v1205, -inf
        %1212 = vmax.xlane.f32.xlu0 %v1211
        %v1213 = vpop.xlane.xlu0 %1212
        %v1214 = vsel %vm1088, %v1208, -inf
        %1215 = vmax.xlane.f32.xlu0 %v1214
        %v1216 = vpop.xlane.xlu0 %1215
        %v1217 = vsub.f32 %v1205, %v1213
        %v1218 = vsub.f32 %v1208, %v1216
        %v1219 = vmul.f32 %v1217, 1.442695
        %v1220 = vpow.pop %v1219
        %v1221 = vmul.f32 %v1218, 1.442695
        %v1222 = vpow.pop %v1221
        %v1223 = vsel %vm1088, %v1220, 0.0
        %1224 = vadd.xlane.f32.xlu0 %v1223
        %v1225 = vpop.xlane.xlu0 %1224
        %v1226 = vsel %vm1088, %v1222, 0.0
        %1227 = vadd.xlane.f32.xlu0 %v1226
        %v1228 = vpop.xlane.xlu0 %1227
        %v1229 = vrcp.pop %v1225
        %v1230 = vrcp.pop %v1228
        %v1231 = vmul.f32 %v1220, %v1229
        %v1232 = vmul.f32 %v1222, %v1230
        %v1233 = vpack.c.bf16 %v1232, %v1231
        %1235 = vrot.lane.b32.xlu0 %v1039, 96
        %v1236 = vpop.permute.xlu0 %1235
        %v1239 = vsel %vm1088, %v1233, 0
        %1241 = vmatprep.subr.bf16.mxu0 0
        %1242 = vmatpush1.bf16.msra.mxu0 %v1236
        %1243 = vmatprep.subr.bf16.mxu0 0
        %1244 = vmatpush1.bf16.msra.mxu0 0
        %1245 = vmatprep.subr.bf16.mxu0 0
        %1246 = vmatpush1.bf16.msra.mxu0 0
        %1247 = vmatprep.subr.bf16.mxu0 0
        %1248 = vmatpush1.bf16.msra.mxu0 0
        %1249 = vmatprep.subr.bf16.mxu0 0
        %1250 = vmatpush1.bf16.msra.mxu0 0
        %1251 = vmatprep.subr.bf16.mxu0 0
        %1252 = vmatpush1.bf16.msra.mxu0 0
        %1253 = vmatprep.subr.bf16.mxu0 0
        %1254 = vmatpush1.bf16.msra.mxu0 0
        %1255 = vmatprep.subr.bf16.mxu0 0
        %1256 = vmatpush1.bf16.msra.mxu0 0
        %1257 = vmatprep.subr.bf16.mxu0 0
        %1258 = vmatpush1.bf16.msra.mxu0 0
        %1259 = vmatprep.subr.bf16.mxu0 0
        %1260 = vmatpush1.bf16.msra.mxu0 0
        %1261 = vmatprep.subr.bf16.mxu0 0
        %1262 = vmatpush1.bf16.msra.mxu0 0
        %1263 = vmatprep.subr.bf16.mxu0 0
        %1264 = vmatpush1.bf16.msra.mxu0 0
        %1265 = vmatprep.subr.bf16.mxu0 0
        %1266 = vmatpush1.bf16.msra.mxu0 0
        %1267 = vmatprep.subr.bf16.mxu0 0
        %1268 = vmatpush1.bf16.msra.mxu0 0
        %1269 = vmatprep.subr.bf16.mxu0 0
        %1270 = vmatpush1.bf16.msra.mxu0 0
        %1271 = vmatprep.subr.bf16.mxu0 0
        %1272 = vmatpush1.bf16.msra.mxu0 0
        %1273 = vmatprep.mubr.bf16.mxu0 0
        %1274 = vmatmul.mubr.bf16.gmra.mrb[0].mxu0 %v1239
        %v1275 = vpop.f32.mrb[0].mxu0
        %v1276 = vadd.f32 0.0, %v1275
        %v1277 = vpop.f32.mrb[0].mxu0
        %v1278 = vpop.f32.mrb[0].mxu0
        %v1279 = vadd.f32 0.0, %v1278
        %v1280 = vpop.f32.mrb[0].mxu0
        %1281 = vdwg.mxu0
        %1284 = vrot.lane.b32.xlu0 %v1276, 32
        %v1285 = vpop.permute.xlu0 %1284
        %1286 = vrot.lane.b32.xlu0 %v1279, 32
        %v1287 = vpop.permute.xlu0 %1286
        %vm1290 = vcmask 523520
        %1291 = vst.msk [vmem:[#allocation2] sm:$0xff] %vm1290, %v1285
        %1292 = vst.msk [vmem:[#allocation2 + $0x8] sm:$0xff] %vm1290, %v1287
        %1293 = vrot.lane.b32.xlu0 %v1037, 64
        %v1294 = vpop.permute.xlu0 %1293
        %1295 = vrot.lane.b32.xlu0 %v1038, 64
        %v1296 = vpop.permute.xlu0 %1295
        %v1298 = vsel %vm1040, %v1294, 0
        %v1301 = vsel %vm1040, %v1296, 0
        %1303 = vmatprep.subr.bf16.mxu0 0
        %1304 = vmatpush1.bf16.xpose.msra.mxu0 %v1301
        %1305 = vmatprep.subr.bf16.mxu0 0
        %1306 = vmatpush1.bf16.xpose.msra.mxu0 0
        %1307 = vmatprep.subr.bf16.mxu0 0
        %1308 = vmatpush1.bf16.xpose.msra.mxu0 0
        %1309 = vmatprep.subr.bf16.mxu0 0
        %1310 = vmatpush1.bf16.xpose.msra.mxu0 0
        %1311 = vmatprep.subr.bf16.mxu0 0
        %1312 = vmatpush1.bf16.xpose.msra.mxu0 0
        %1313 = vmatprep.subr.bf16.mxu0 0
        %1314 = vmatpush1.bf16.xpose.msra.mxu0 0
        %1315 = vmatprep.subr.bf16.mxu0 0
        %1316 = vmatpush1.bf16.xpose.msra.mxu0 0
        %1317 = vmatprep.subr.bf16.mxu0 0
        %1318 = vmatpush1.bf16.xpose.msra.mxu0 0
        %1319 = vmatprep.subr.bf16.mxu0 0
        %1320 = vmatpush1.bf16.xpose.msra.mxu0 0
        %1321 = vmatprep.subr.bf16.mxu0 0
        %1322 = vmatpush1.bf16.xpose.msra.mxu0 0
        %1323 = vmatprep.subr.bf16.mxu0 0
        %1324 = vmatpush1.bf16.xpose.msra.mxu0 0
        %1325 = vmatprep.subr.bf16.mxu0 0
        %1326 = vmatpush1.bf16.xpose.msra.mxu0 0
        %1327 = vmatprep.subr.bf16.mxu0 0
        %1328 = vmatpush1.bf16.xpose.msra.mxu0 0
        %1329 = vmatprep.subr.bf16.mxu0 0
        %1330 = vmatpush1.bf16.xpose.msra.mxu0 0
        %1331 = vmatprep.subr.bf16.mxu0 0
        %1332 = vmatpush1.bf16.xpose.msra.mxu0 0
        %1333 = vmatprep.subr.bf16.mxu0 0
        %1334 = vmatpush1.bf16.xpose.msra.mxu0 0
        %1335 = vmatprep.mubr.bf16.mxu0 0
        %1336 = vmatmul.mubr.bf16.gmra.mrb[0].mxu0 %v1298
        %v1337 = vpop.f32.mrb[0].mxu0
        %v1338 = vadd.f32 0.0, %v1337
        %v1339 = vpop.f32.mrb[0].mxu0
        %v1340 = vpop.f32.mrb[0].mxu0
        %v1341 = vadd.f32 0.0, %v1340
        %v1342 = vpop.f32.mrb[0].mxu0
        %1343 = vdwg.mxu0
        %v1344 = vsel %vm1088, %v1338, -inf
        %1345 = vmax.xlane.f32.xlu0 %v1344
        %v1346 = vpop.xlane.xlu0 %1345
        %v1347 = vsel %vm1088, %v1341, -inf
        %1348 = vmax.xlane.f32.xlu0 %v1347
        %v1349 = vpop.xlane.xlu0 %1348
        %v1350 = vsub.f32 %v1338, %v1346
        %v1351 = vsub.f32 %v1341, %v1349
        %v1352 = vmul.f32 %v1350, 1.442695
        %v1353 = vpow.pop %v1352
        %v1354 = vmul.f32 %v1351, 1.442695
        %v1355 = vpow.pop %v1354
        %v1356 = vsel %vm1088, %v1353, 0.0
        %1357 = vadd.xlane.f32.xlu0 %v1356
        %v1358 = vpop.xlane.xlu0 %1357
        %v1359 = vsel %vm1088, %v1355, 0.0
        %1360 = vadd.xlane.f32.xlu0 %v1359
        %v1361 = vpop.xlane.xlu0 %1360
        %v1362 = vrcp.pop %v1358
        %v1363 = vrcp.pop %v1361
        %v1364 = vmul.f32 %v1353, %v1362
        %v1365 = vmul.f32 %v1355, %v1363
        %v1366 = vpack.c.bf16 %v1365, %v1364
        %1367 = vrot.lane.b32.xlu0 %v1039, 64
        %v1368 = vpop.permute.xlu0 %1367
        %v1371 = vsel %vm1088, %v1366, 0
        %1373 = vmatprep.subr.bf16.mxu0 0
        %1374 = vmatpush1.bf16.msra.mxu0 %v1368
        %1375 = vmatprep.subr.bf16.mxu0 0
        %1376 = vmatpush1.bf16.msra.mxu0 0
        %1377 = vmatprep.subr.bf16.mxu0 0
        %1378 = vmatpush1.bf16.msra.mxu0 0
        %1379 = vmatprep.subr.bf16.mxu0 0
        %1380 = vmatpush1.bf16.msra.mxu0 0
        %1381 = vmatprep.subr.bf16.mxu0 0
        %1382 = vmatpush1.bf16.msra.mxu0 0
        %1383 = vmatprep.subr.bf16.mxu0 0
        %1384 = vmatpush1.bf16.msra.mxu0 0
        %1385 = vmatprep.subr.bf16.mxu0 0
        %1386 = vmatpush1.bf16.msra.mxu0 0
        %1387 = vmatprep.subr.bf16.mxu0 0
        %1388 = vmatpush1.bf16.msra.mxu0 0
        %1389 = vmatprep.subr.bf16.mxu0 0
        %1390 = vmatpush1.bf16.msra.mxu0 0
        %1391 = vmatprep.subr.bf16.mxu0 0
        %1392 = vmatpush1.bf16.msra.mxu0 0
        %1393 = vmatprep.subr.bf16.mxu0 0
        %1394 = vmatpush1.bf16.msra.mxu0 0
        %1395 = vmatprep.subr.bf16.mxu0 0
        %1396 = vmatpush1.bf16.msra.mxu0 0
        %1397 = vmatprep.subr.bf16.mxu0 0
        %1398 = vmatpush1.bf16.msra.mxu0 0
        %1399 = vmatprep.subr.bf16.mxu0 0
        %1400 = vmatpush1.bf16.msra.mxu0 0
        %1401 = vmatprep.subr.bf16.mxu0 0
        %1402 = vmatpush1.bf16.msra.mxu0 0
        %1403 = vmatprep.subr.bf16.mxu0 0
        %1404 = vmatpush1.bf16.msra.mxu0 0
        %1405 = vmatprep.mubr.bf16.mxu0 0
        %1406 = vmatmul.mubr.bf16.gmra.mrb[0].mxu0 %v1371
        %v1407 = vpop.f32.mrb[0].mxu0
        %v1408 = vadd.f32 0.0, %v1407
        %v1409 = vpop.f32.mrb[0].mxu0
        %v1410 = vpop.f32.mrb[0].mxu0
        %v1411 = vadd.f32 0.0, %v1410
        %v1412 = vpop.f32.mrb[0].mxu0
        %1413 = vdwg.mxu0
        %1416 = vrot.lane.b32.xlu0 %v1408, 64
        %v1417 = vpop.permute.xlu0 %1416
        %1418 = vrot.lane.b32.xlu0 %v1411, 64
        %v1419 = vpop.permute.xlu0 %1418
        %vm1422 = vcmask 785920
        %1423 = vst.msk [vmem:[#allocation2] sm:$0xff] %vm1422, %v1417
        %1424 = vst.msk [vmem:[#allocation2 + $0x8] sm:$0xff] %vm1422, %v1419
        %1425 = vrot.lane.b32.xlu0 %v1037, 32
        %v1426 = vpop.permute.xlu0 %1425
        %1427 = vrot.lane.b32.xlu0 %v1038, 32
        %v1428 = vpop.permute.xlu0 %1427
        %v1430 = vsel %vm1040, %v1426, 0
        %v1433 = vsel %vm1040, %v1428, 0
        %1435 = vmatprep.subr.bf16.mxu0 0
        %1436 = vmatpush1.bf16.xpose.msra.mxu0 %v1433
        %1437 = vmatprep.subr.bf16.mxu0 0
        %1438 = vmatpush1.bf16.xpose.msra.mxu0 0
        %1439 = vmatprep.subr.bf16.mxu0 0
        %1440 = vmatpush1.bf16.xpose.msra.mxu0 0
        %1441 = vmatprep.subr.bf16.mxu0 0
        %1442 = vmatpush1.bf16.xpose.msra.mxu0 0
        %1443 = vmatprep.subr.bf16.mxu0 0
        %1444 = vmatpush1.bf16.xpose.msra.mxu0 0
        %1445 = vmatprep.subr.bf16.mxu0 0
        %1446 = vmatpush1.bf16.xpose.msra.mxu0 0
        %1447 = vmatprep.subr.bf16.mxu0 0
        %1448 = vmatpush1.bf16.xpose.msra.mxu0 0
        %1449 = vmatprep.subr.bf16.mxu0 0
        %1450 = vmatpush1.bf16.xpose.msra.mxu0 0
        %1451 = vmatprep.subr.bf16.mxu0 0
        %1452 = vmatpush1.bf16.xpose.msra.mxu0 0
        %1453 = vmatprep.subr.bf16.mxu0 0
        %1454 = vmatpush1.bf16.xpose.msra.mxu0 0
        %1455 = vmatprep.subr.bf16.mxu0 0
        %1456 = vmatpush1.bf16.xpose.msra.mxu0 0
        %1457 = vmatprep.subr.bf16.mxu0 0
        %1458 = vmatpush1.bf16.xpose.msra.mxu0 0
        %1459 = vmatprep.subr.bf16.mxu0 0
        %1460 = vmatpush1.bf16.xpose.msra.mxu0 0
        %1461 = vmatprep.subr.bf16.mxu0 0
        %1462 = vmatpush1.bf16.xpose.msra.mxu0 0
        %1463 = vmatprep.subr.bf16.mxu0 0
        %1464 = vmatpush1.bf16.xpose.msra.mxu0 0
        %1465 = vmatprep.subr.bf16.mxu0 0
        %1466 = vmatpush1.bf16.xpose.msra.mxu0 0
        %1467 = vmatprep.mubr.bf16.mxu0 0
        %1468 = vmatmul.mubr.bf16.gmra.mrb[0].mxu0 %v1430
        %v1469 = vpop.f32.mrb[0].mxu0
        %v1470 = vadd.f32 0.0, %v1469
        %v1471 = vpop.f32.mrb[0].mxu0
        %v1472 = vpop.f32.mrb[0].mxu0
        %v1473 = vadd.f32 0.0, %v1472
        %v1474 = vpop.f32.mrb[0].mxu0
        %1475 = vdwg.mxu0
        %v1476 = vsel %vm1088, %v1470, -inf
        %1477 = vmax.xlane.f32.xlu0 %v1476
        %v1478 = vpop.xlane.xlu0 %1477
        %v1479 = vsel %vm1088, %v1473, -inf
        %1480 = vmax.xlane.f32.xlu0 %v1479
        %v1481 = vpop.xlane.xlu0 %1480
        %v1482 = vsub.f32 %v1470, %v1478
        %v1483 = vsub.f32 %v1473, %v1481
        %v1484 = vmul.f32 %v1482, 1.442695
        %v1485 = vpow.pop %v1484
        %v1486 = vmul.f32 %v1483, 1.442695
        %v1487 = vpow.pop %v1486
        %v1488 = vsel %vm1088, %v1485, 0.0
        %1489 = vadd.xlane.f32.xlu0 %v1488
        %v1490 = vpop.xlane.xlu0 %1489
        %v1491 = vsel %vm1088, %v1487, 0.0
        %1492 = vadd.xlane.f32.xlu0 %v1491
        %v1493 = vpop.xlane.xlu0 %1492
        %v1494 = vrcp.pop %v1490
        %v1495 = vrcp.pop %v1493
        %v1496 = vmul.f32 %v1485, %v1494
        %v1497 = vmul.f32 %v1487, %v1495
        %v1498 = vpack.c.bf16 %v1497, %v1496
        %1499 = vrot.lane.b32.xlu0 %v1039, 32
        %v1500 = vpop.permute.xlu0 %1499
        %v1503 = vsel %vm1088, %v1498, 0
        %1505 = vmatprep.subr.bf16.mxu0 0
        %1506 = vmatpush1.bf16.msra.mxu0 %v1500
        %1507 = vmatprep.subr.bf16.mxu0 0
        %1508 = vmatpush1.bf16.msra.mxu0 0
        %1509 = vmatprep.subr.bf16.mxu0 0
        %1510 = vmatpush1.bf16.msra.mxu0 0
        %1511 = vmatprep.subr.bf16.mxu0 0
        %1512 = vmatpush1.bf16.msra.mxu0 0
        %1513 = vmatprep.subr.bf16.mxu0 0
        %1514 = vmatpush1.bf16.msra.mxu0 0
        %1515 = vmatprep.subr.bf16.mxu0 0
        %1516 = vmatpush1.bf16.msra.mxu0 0
        %1517 = vmatprep.subr.bf16.mxu0 0
        %1518 = vmatpush1.bf16.msra.mxu0 0
        %1519 = vmatprep.subr.bf16.mxu0 0
        %1520 = vmatpush1.bf16.msra.mxu0 0
        %1521 = vmatprep.subr.bf16.mxu0 0
        %1522 = vmatpush1.bf16.msra.mxu0 0
        %1523 = vmatprep.subr.bf16.mxu0 0
        %1524 = vmatpush1.bf16.msra.mxu0 0
        %1525 = vmatprep.subr.bf16.mxu0 0
        %1526 = vmatpush1.bf16.msra.mxu0 0
        %1527 = vmatprep.subr.bf16.mxu0 0
        %1528 = vmatpush1.bf16.msra.mxu0 0
        %1529 = vmatprep.subr.bf16.mxu0 0
        %1530 = vmatpush1.bf16.msra.mxu0 0
        %1531 = vmatprep.subr.bf16.mxu0 0
        %1532 = vmatpush1.bf16.msra.mxu0 0
        %1533 = vmatprep.subr.bf16.mxu0 0
        %1534 = vmatpush1.bf16.msra.mxu0 0
        %1535 = vmatprep.subr.bf16.mxu0 0
        %1536 = vmatpush1.bf16.msra.mxu0 0
        %1537 = vmatprep.mubr.bf16.mxu0 0
        %1538 = vmatmul.mubr.bf16.gmra.mrb[0].mxu0 %v1503
        %v1539 = vpop.f32.mrb[0].mxu0
        %v1540 = vadd.f32 0.0, %v1539
        %v1541 = vpop.f32.mrb[0].mxu0
        %v1542 = vpop.f32.mrb[0].mxu0
        %v1543 = vadd.f32 0.0, %v1542
        %v1544 = vpop.f32.mrb[0].mxu0
        %1545 = vdwg.mxu0
        %1548 = vrot.lane.b32.xlu0 %v1540, 96
        %v1549 = vpop.permute.xlu0 %1548
        %1550 = vrot.lane.b32.xlu0 %v1543, 96
        %v1551 = vpop.permute.xlu0 %1550
        %vm1554 = vcmask 1048320
        %1555 = vst.msk [vmem:[#allocation2] sm:$0xff] %vm1554, %v1549
        %1556 = vst.msk [vmem:[#allocation2 + $0x8] sm:$0xff] %vm1554, %v1551
        %v1557 = vld [vmem:[#allocation2] sm:$0xff]
        %v1558 = vld [vmem:[#allocation2 + $0x8] sm:$0xff]
        %v1559 = vpack.c.bf16 %v1558, %v1557
        %v1560 = vld [vmem:[#allocation11] sm:$0xf]
        %v1561 = vld [vmem:[#allocation11 + $0x4] sm:$0xf]
        %v1562 = vld [vmem:[#allocation11 + $0x8] sm:$0xf]
        %v1563 = vld [vmem:[#allocation11 + $0xc] sm:$0xf]
        %v1564 = vld [vmem:[#allocation11 + $0x10] sm:$0xf]
        %v1565 = vld [vmem:[#allocation11 + $0x14] sm:$0xf]
        %v1566 = vld [vmem:[#allocation11 + $0x18] sm:$0xf]
        %v1567 = vld [vmem:[#allocation11 + $0x1c] sm:$0xf]
        %v1568 = vld [vmem:[#allocation11 + $0x20] sm:$0xf]
        %v1569 = vld [vmem:[#allocation11 + $0x24] sm:$0xf]
        %v1570 = vld [vmem:[#allocation11 + $0x28] sm:$0xf]
        %v1571 = vld [vmem:[#allocation11 + $0x2c] sm:$0xf]
        %v1572 = vld [vmem:[#allocation11 + $0x30] sm:$0xf]
        %v1573 = vld [vmem:[#allocation11 + $0x34] sm:$0xf]
        %v1574 = vld [vmem:[#allocation11 + $0x38] sm:$0xf]
        %v1575 = vld [vmem:[#allocation11 + $0x3c] sm:$0xf]
        %v1576 = vld [vmem:[%s10] sm:$0x1]
        %v1578 = vlaneseq
        %v1579 = vshrl.u32 %v1578, 7
        %v1580 = vsub.s32 0, %v1579
        %v1581 = vrot.slane %v1576, %v1580
        %v1599 = vunpack.c.l.b16 %v1560
        %v1600 = vunpack.c.l.b16 %v1561
        %v1601 = vunpack.c.l.b16 %v1562
        %v1602 = vunpack.c.l.b16 %v1563
        %v1603 = vunpack.c.l.b16 %v1564
        %v1604 = vunpack.c.l.b16 %v1565
        %v1605 = vunpack.c.l.b16 %v1566
        %v1606 = vunpack.c.l.b16 %v1567
        %v1607 = vunpack.c.l.b16 %v1568
        %v1608 = vunpack.c.l.b16 %v1569
        %v1609 = vunpack.c.l.b16 %v1570
        %v1610 = vunpack.c.l.b16 %v1571
        %v1611 = vunpack.c.l.b16 %v1572
        %v1612 = vunpack.c.l.b16 %v1573
        %v1613 = vunpack.c.l.b16 %v1574
        %v1614 = vunpack.c.l.b16 %v1575
        %v1615 = vpack.c.b16 %v1600, %v1599
        %v1616 = vpack.c.b16 %v1602, %v1601
        %v1617 = vpack.c.b16 %v1604, %v1603
        %v1618 = vpack.c.b16 %v1606, %v1605
        %v1619 = vpack.c.b16 %v1608, %v1607
        %v1620 = vpack.c.b16 %v1610, %v1609
        %v1621 = vpack.c.b16 %v1612, %v1611
        %v1622 = vpack.c.b16 %v1614, %v1613
        %1631 = vmatprep.subr.bf16.mxu0 0
        %1632 = vmatpush1.bf16.msra.mxu0 %v1615
        %1633 = vmatprep.subr.bf16.mxu0 0
        %1634 = vmatpush1.bf16.msra.mxu0 %v1616
        %1635 = vmatprep.subr.bf16.mxu0 0
        %1636 = vmatpush1.bf16.msra.mxu0 %v1617
        %1637 = vmatprep.subr.bf16.mxu0 0
        %1638 = vmatpush1.bf16.msra.mxu0 %v1618
        %1639 = vmatprep.subr.bf16.mxu0 0
        %1640 = vmatpush1.bf16.msra.mxu0 %v1619
        %1641 = vmatprep.subr.bf16.mxu0 0
        %1642 = vmatpush1.bf16.msra.mxu0 %v1620
        %1643 = vmatprep.subr.bf16.mxu0 0
        %1644 = vmatpush1.bf16.msra.mxu0 %v1621
        %1645 = vmatprep.subr.bf16.mxu0 0
        %1646 = vmatpush1.bf16.msra.mxu0 %v1622
        %1647 = vmatprep.subr.bf16.mxu0 0
        %1648 = vmatpush1.bf16.msra.mxu0 0
        %1649 = vmatprep.subr.bf16.mxu0 0
        %1650 = vmatpush1.bf16.msra.mxu0 0
        %1651 = vmatprep.subr.bf16.mxu0 0
        %1652 = vmatpush1.bf16.msra.mxu0 0
        %1653 = vmatprep.subr.bf16.mxu0 0
        %1654 = vmatpush1.bf16.msra.mxu0 0
        %1655 = vmatprep.subr.bf16.mxu0 0
        %1656 = vmatpush1.bf16.msra.mxu0 0
        %1657 = vmatprep.subr.bf16.mxu0 0
        %1658 = vmatpush1.bf16.msra.mxu0 0
        %1659 = vmatprep.subr.bf16.mxu0 0
        %1660 = vmatpush1.bf16.msra.mxu0 0
        %1661 = vmatprep.subr.bf16.mxu0 0
        %1662 = vmatpush1.bf16.msra.mxu0 0
        %1663 = vmatprep.mubr.bf16.mxu0 0
        %1664 = vmatmul.mubr.bf16.gmra.mrb[0].mxu0 %v1559
        %v1665 = vpop.f32.mrb[0].mxu0
        %v1666 = vadd.f32 %v1581, %v1665
        %v1667 = vpop.f32.mrb[0].mxu0
        %v1668 = vpop.f32.mrb[0].mxu0
        %v1669 = vadd.f32 %v1581, %v1668
        %v1670 = vpop.f32.mrb[0].mxu0
        %1671 = vdwg.mxu0
        %v1672 = vadd.f32 %v1666, %v655
        %v1673 = vadd.f32 %v1669, %v656
        %v1674 = vld [vmem:[%s11] sm:$0x1]
        %v1675 = vld [vmem:[%s12] sm:$0x1]
        %1676 = vadd.xlane.f32.xlu0 %v1672
        %v1677 = vpop.xlane.xlu0 %1676
        %1678 = vadd.xlane.f32.xlu0 %v1673
        %v1679 = vpop.xlane.xlu0 %1678
        %v1680 = vmul.f32 %v1677, %v663
        %v1681 = vmul.f32 %v1679, %v663
        %v1682 = vsub.f32 %v1672, %v1680
        %v1683 = vsub.f32 %v1673, %v1681
        %v1684 = vmul.f32 %v1682, %v1682
        %v1685 = vmul.f32 %v1683, %v1683
        %1686 = vadd.xlane.f32.xlu0 %v1684
        %v1687 = vpop.xlane.xlu0 %1686
        %1688 = vadd.xlane.f32.xlu0 %v1685
        %v1689 = vpop.xlane.xlu0 %1688
        %v1690 = vmul.f32 %v1687, %v663
        %v1691 = vmul.f32 %v1689, %v663
        %v1692 = vadd.f32 %v1690, 1e-05
        %v1693 = vadd.f32 %v1691, 1e-05
        %v1694 = vrsqrt.pop %v1692
        %v1695 = vrsqrt.pop %v1693
        %v1696 = vmul.f32 %v1682, %v1694
        %v1697 = vmul.f32 %v1683, %v1695
        %v1699 = vlaneseq
        %v1700 = vshrl.u32 %v1699, 7
        %v1701 = vsub.s32 0, %v1700
        %v1702 = vrot.slane %v1674, %v1701
        %v1704 = vmul.f32 %v1696, %v1702
        %v1705 = vmul.f32 %v1697, %v1702
        %v1707 = vlaneseq
        %v1708 = vshrl.u32 %v1707, 7
        %v1709 = vsub.s32 0, %v1708
        %v1710 = vrot.slane %v1675, %v1709
        %v1712 = vadd.f32 %v1704, %v1710
        %v1713 = vadd.f32 %v1705, %v1710
        %v1714 = vpack.c.bf16 %v1713, %v1712
        %v1715 = vld [vmem:[#allocation12] sm:$0xff]
        %v1716 = vld [vmem:[#allocation12 + $0x8] sm:$0xff]
        %v1717 = vld [vmem:[#allocation12 + $0x10] sm:$0xff]
        %v1718 = vld [vmem:[#allocation12 + $0x18] sm:$0xff]
        %v1719 = vld [vmem:[#allocation12 + $0x20] sm:$0xff]
        %v1720 = vld [vmem:[#allocation12 + $0x28] sm:$0xff]
        %v1721 = vld [vmem:[#allocation12 + $0x30] sm:$0xff]
        %v1722 = vld [vmem:[#allocation12 + $0x38] sm:$0xff]
        %v1723 = vld [vmem:[#allocation12 + $0x40] sm:$0xff]
        %v1724 = vld [vmem:[#allocation12 + $0x48] sm:$0xff]
        %v1725 = vld [vmem:[#allocation12 + $0x50] sm:$0xff]
        %v1726 = vld [vmem:[#allocation12 + $0x58] sm:$0xff]
        %v1727 = vld [vmem:[#allocation12 + $0x60] sm:$0xff]
        %v1728 = vld [vmem:[#allocation12 + $0x68] sm:$0xff]
        %v1729 = vld [vmem:[#allocation12 + $0x70] sm:$0xff]
        %v1730 = vld [vmem:[#allocation12 + $0x78] sm:$0xff]
        %v1731 = vld [vmem:[%s14] sm:$0x3]
        %v1733 = vlaneseq
        %v1734 = vshrl.u32 %v1733, 7
        %v1735 = vsub.s32 0, %v1734
        %v1736 = vrot.slane %v1731, %v1735
        %v1737 = vlaneseq
        %v1738 = vshrl.u32 %v1737, 7
        %v1739 = vsub.s32 1, %v1738
        %v1740 = vrot.slane %v1731, %v1739
        %v1759 = vunpack.c.l.b16 %v1715
        %v1760 = vunpack.c.h.b16 %v1715
        %v1761 = vunpack.c.l.b16 %v1716
        %v1762 = vunpack.c.h.b16 %v1716
        %v1763 = vunpack.c.l.b16 %v1717
        %v1764 = vunpack.c.h.b16 %v1717
        %v1765 = vunpack.c.l.b16 %v1718
        %v1766 = vunpack.c.h.b16 %v1718
        %v1767 = vunpack.c.l.b16 %v1719
        %v1768 = vunpack.c.h.b16 %v1719
        %v1769 = vunpack.c.l.b16 %v1720
        %v1770 = vunpack.c.h.b16 %v1720
        %v1771 = vunpack.c.l.b16 %v1721
        %v1772 = vunpack.c.h.b16 %v1721
        %v1773 = vunpack.c.l.b16 %v1722
        %v1774 = vunpack.c.h.b16 %v1722
        %v1775 = vunpack.c.l.b16 %v1723
        %v1776 = vunpack.c.h.b16 %v1723
        %v1777 = vunpack.c.l.b16 %v1724
        %v1778 = vunpack.c.h.b16 %v1724
        %v1779 = vunpack.c.l.b16 %v1725
        %v1780 = vunpack.c.h.b16 %v1725
        %v1781 = vunpack.c.l.b16 %v1726
        %v1782 = vunpack.c.h.b16 %v1726
        %v1783 = vunpack.c.l.b16 %v1727
        %v1784 = vunpack.c.h.b16 %v1727
        %v1785 = vunpack.c.l.b16 %v1728
        %v1786 = vunpack.c.h.b16 %v1728
        %v1787 = vunpack.c.l.b16 %v1729
        %v1788 = vunpack.c.h.b16 %v1729
        %v1789 = vunpack.c.l.b16 %v1730
        %v1790 = vunpack.c.h.b16 %v1730
        %v1791 = vpack.c.b16 %v1761, %v1759
        %v1792 = vpack.c.b16 %v1762, %v1760
        %v1793 = vpack.c.b16 %v1765, %v1763
        %v1794 = vpack.c.b16 %v1766, %v1764
        %v1795 = vpack.c.b16 %v1769, %v1767
        %v1796 = vpack.c.b16 %v1770, %v1768
        %v1797 = vpack.c.b16 %v1773, %v1771
        %v1798 = vpack.c.b16 %v1774, %v1772
        %v1799 = vpack.c.b16 %v1777, %v1775
        %v1800 = vpack.c.b16 %v1778, %v1776
        %v1801 = vpack.c.b16 %v1781, %v1779
        %v1802 = vpack.c.b16 %v1782, %v1780
        %v1803 = vpack.c.b16 %v1785, %v1783
        %v1804 = vpack.c.b16 %v1786, %v1784
        %v1805 = vpack.c.b16 %v1789, %v1787
        %v1806 = vpack.c.b16 %v1790, %v1788
        %1823 = vmatprep.subr.bf16.mxu0 %v1792
        %1824 = vmatpush1.bf16.msra.mxu0 %v1791
        %1825 = vmatprep.subr.bf16.mxu0 %v1794
        %1826 = vmatpush1.bf16.msra.mxu0 %v1793
        %1827 = vmatprep.subr.bf16.mxu0 %v1796
        %1828 = vmatpush1.bf16.msra.mxu0 %v1795
        %1829 = vmatprep.subr.bf16.mxu0 %v1798
        %1830 = vmatpush1.bf16.msra.mxu0 %v1797
        %1831 = vmatprep.subr.bf16.mxu0 %v1800
        %1832 = vmatpush1.bf16.msra.mxu0 %v1799
        %1833 = vmatprep.subr.bf16.mxu0 %v1802
        %1834 = vmatpush1.bf16.msra.mxu0 %v1801
        %1835 = vmatprep.subr.bf16.mxu0 %v1804
        %1836 = vmatpush1.bf16.msra.mxu0 %v1803
        %1837 = vmatprep.subr.bf16.mxu0 %v1806
        %1838 = vmatpush1.bf16.msra.mxu0 %v1805
        %1839 = vmatprep.subr.bf16.mxu0 0
        %1840 = vmatpush1.bf16.msra.mxu0 0
        %1841 = vmatprep.subr.bf16.mxu0 0
        %1842 = vmatpush1.bf16.msra.mxu0 0
        %1843 = vmatprep.subr.bf16.mxu0 0
        %1844 = vmatpush1.bf16.msra.mxu0 0
        %1845 = vmatprep.subr.bf16.mxu0 0
        %1846 = vmatpush1.bf16.msra.mxu0 0
        %1847 = vmatprep.subr.bf16.mxu0 0
        %1848 = vmatpush1.bf16.msra.mxu0 0
        %1849 = vmatprep.subr.bf16.mxu0 0
        %1850 = vmatpush1.bf16.msra.mxu0 0
        %1851 = vmatprep.subr.bf16.mxu0 0
        %1852 = vmatpush1.bf16.msra.mxu0 0
        %1853 = vmatprep.subr.bf16.mxu0 0
        %1854 = vmatpush1.bf16.msra.mxu0 0
        %1855 = vmatprep.mubr.bf16.mxu0 0
        %1856 = vmatmul.mubr.bf16.gmra.mrb[0].mxu0 %v1714
        %v1857 = vpop.f32.mrb[0].mxu0
        %v1858 = vadd.f32 %v1736, %v1857
        %v1859 = vpop.f32.mrb[0].mxu0
        %v1860 = vadd.f32 %v1740, %v1859
        %v1861 = vpop.f32.mrb[0].mxu0
        %v1862 = vadd.f32 %v1736, %v1861
        %v1863 = vpop.f32.mrb[0].mxu0
        %v1864 = vadd.f32 %v1740, %v1863
        %1865 = vdwg.mxu0
        %v1866 = vmul.f32 %v1858, 0.5
        %v1867 = vmul.f32 %v1860, 0.5
        %v1868 = vmul.f32 %v1862, 0.5
        %v1869 = vmul.f32 %v1864, 0.5
        %v1870 = vmul.f32 %v1858, 0.70710677
        %v1871 = vmul.f32 %v1860, 0.70710677
        %v1872 = vmul.f32 %v1862, 0.70710677
        %v1873 = vmul.f32 %v1864, 0.70710677
        %v1874 = vand.u32 2147483647, %v1870
        %v1875 = vand.u32 2147483647, %v1871
        %v1876 = vand.u32 2147483647, %v1872
        %v1877 = vand.u32 2147483647, %v1873
        %v1878 = vmul.f32 %v1874, 0.3275911
        %v1879 = vmul.f32 %v1875, 0.3275911
        %v1880 = vmul.f32 %v1876, 0.3275911
        %v1881 = vmul.f32 %v1877, 0.3275911
        %v1882 = vadd.f32 %v1878, 1.0
        %v1883 = vadd.f32 %v1879, 1.0
        %v1884 = vadd.f32 %v1880, 1.0
        %v1885 = vadd.f32 %v1881, 1.0
        %v1886 = vrcp.pop %v1882
        %v1887 = vrcp.pop %v1883
        %v1888 = vrcp.pop %v1884
        %v1889 = vrcp.pop %v1885
        %v1890 = vmul.f32 %v1886, 1.0614054
        %v1891 = vmul.f32 %v1887, 1.0614054
        %v1892 = vmul.f32 %v1888, 1.0614054
        %v1893 = vmul.f32 %v1889, 1.0614054
        %v1894 = vadd.f32 %v1890, -1.4531521
        %v1895 = vadd.f32 %v1891, -1.4531521
        %v1896 = vadd.f32 %v1892, -1.4531521
        %v1897 = vadd.f32 %v1893, -1.4531521
        %v1898 = vmul.f32 %v1894, %v1886
        %v1899 = vmul.f32 %v1895, %v1887
        %v1900 = vmul.f32 %v1896, %v1888
        %v1901 = vmul.f32 %v1897, %v1889
        %v1902 = vadd.f32 %v1898, 1.4214138
        %v1903 = vadd.f32 %v1899, 1.4214138
        %v1904 = vadd.f32 %v1900, 1.4214138
        %v1905 = vadd.f32 %v1901, 1.4214138
        %v1906 = vmul.f32 %v1902, %v1886
        %v1907 = vmul.f32 %v1903, %v1887
        %v1908 = vmul.f32 %v1904, %v1888
        %v1909 = vmul.f32 %v1905, %v1889
        %v1910 = vadd.f32 %v1906, -0.28449672
        %v1911 = vadd.f32 %v1907, -0.28449672
        %v1912 = vadd.f32 %v1908, -0.28449672
        %v1913 = vadd.f32 %v1909, -0.28449672
        %v1914 = vmul.f32 %v1910, %v1886
        %v1915 = vmul.f32 %v1911, %v1887
        %v1916 = vmul.f32 %v1912, %v1888
        %v1917 = vmul.f32 %v1913, %v1889
        %v1918 = vadd.f32 %v1914, 0.2548296
        %v1919 = vadd.f32 %v1915, 0.2548296
        %v1920 = vadd.f32 %v1916, 0.2548296
        %v1921 = vadd.f32 %v1917, 0.2548296
        %v1922 = vmul.f32 %v1918, %v1886
        %v1923 = vmul.f32 %v1919, %v1887
        %v1924 = vmul.f32 %v1920, %v1888
        %v1925 = vmul.f32 %v1921, %v1889
        %v1926 = vsub.f32 0.0, %v1874
        %v1927 = vsub.f32 0.0, %v1875
        %v1928 = vsub.f32 0.0, %v1876
        %v1929 = vsub.f32 0.0, %v1877
        %v1930 = vmul.f32 %v1926, %v1874
        %v1931 = vmul.f32 %v1927, %v1875
        %v1932 = vmul.f32 %v1928, %v1876
        %v1933 = vmul.f32 %v1929, %v1877
        %v1934 = vmul.f32 %v1930, 1.442695
        %v1935 = vpow.pop %v1934
        %v1936 = vmul.f32 %v1931, 1.442695
        %v1937 = vpow.pop %v1936
        %v1938 = vmul.f32 %v1932, 1.442695
        %v1939 = vpow.pop %v1938
        %v1940 = vmul.f32 %v1933, 1.442695
        %v1941 = vpow.pop %v1940
        %v1942 = vmul.f32 %v1922, %v1935
        %v1943 = vmul.f32 %v1923, %v1937
        %v1944 = vmul.f32 %v1924, %v1939
        %v1945 = vmul.f32 %v1925, %v1941
        %v1946 = vsub.f32 1.0, %v1942
        %v1947 = vsub.f32 1.0, %v1943
        %v1948 = vsub.f32 1.0, %v1944
        %v1949 = vsub.f32 1.0, %v1945
        %vm1950 = vcmp.ge.f32.partialorder %v1870, 0.0
        %vm1951 = vcmp.ge.f32.partialorder %v1871, 0.0
        %vm1952 = vcmp.ge.f32.partialorder %v1872, 0.0
        %vm1953 = vcmp.ge.f32.partialorder %v1873, 0.0
        %v1954 = vsub.f32 0.0, %v1946
        %v1955 = vsub.f32 0.0, %v1947
        %v1956 = vsub.f32 0.0, %v1948
        %v1957 = vsub.f32 0.0, %v1949
        %v1958 = vsel %vm1950, %v1946, %v1954
        %v1959 = vsel %vm1951, %v1947, %v1955
        %v1960 = vsel %vm1952, %v1948, %v1956
        %v1961 = vsel %vm1953, %v1949, %v1957
        %v1962 = vadd.f32 %v1958, 1.0
        %v1963 = vadd.f32 %v1959, 1.0
        %v1964 = vadd.f32 %v1960, 1.0
        %v1965 = vadd.f32 %v1961, 1.0
        %v1966 = vmul.f32 %v1866, %v1962
        %v1967 = vmul.f32 %v1867, %v1963
        %v1968 = vmul.f32 %v1868, %v1964
        %v1969 = vmul.f32 %v1869, %v1965
        %v1970 = vpack.c.bf16 %v1968, %v1966
        %v1971 = vpack.c.bf16 %v1969, %v1967
        %v1972 = vld [vmem:[#allocation14] sm:$0xf]
        %v1973 = vld [vmem:[#allocation14 + $0x4] sm:$0xf]
        %v1974 = vld [vmem:[#allocation14 + $0x8] sm:$0xf]
        %v1975 = vld [vmem:[#allocation14 + $0xc] sm:$0xf]
        %v1976 = vld [vmem:[#allocation14 + $0x10] sm:$0xf]
        %v1977 = vld [vmem:[#allocation14 + $0x14] sm:$0xf]
        %v1978 = vld [vmem:[#allocation14 + $0x18] sm:$0xf]
        %v1979 = vld [vmem:[#allocation14 + $0x1c] sm:$0xf]
        %v1980 = vld [vmem:[#allocation14 + $0x20] sm:$0xf]
        %v1981 = vld [vmem:[#allocation14 + $0x24] sm:$0xf]
        %v1982 = vld [vmem:[#allocation14 + $0x28] sm:$0xf]
        %v1983 = vld [vmem:[#allocation14 + $0x2c] sm:$0xf]
        %v1984 = vld [vmem:[#allocation14 + $0x30] sm:$0xf]
        %v1985 = vld [vmem:[#allocation14 + $0x34] sm:$0xf]
        %v1986 = vld [vmem:[#allocation14 + $0x38] sm:$0xf]
        %v1987 = vld [vmem:[#allocation14 + $0x3c] sm:$0xf]
        %v1988 = vld [vmem:[#allocation14 + $0x40] sm:$0xf]
        %v1989 = vld [vmem:[#allocation14 + $0x44] sm:$0xf]
        %v1990 = vld [vmem:[#allocation14 + $0x48] sm:$0xf]
        %v1991 = vld [vmem:[#allocation14 + $0x4c] sm:$0xf]
        %v1992 = vld [vmem:[#allocation14 + $0x50] sm:$0xf]
        %v1993 = vld [vmem:[#allocation14 + $0x54] sm:$0xf]
        %v1994 = vld [vmem:[#allocation14 + $0x58] sm:$0xf]
        %v1995 = vld [vmem:[#allocation14 + $0x5c] sm:$0xf]
        %v1996 = vld [vmem:[#allocation14 + $0x60] sm:$0xf]
        %v1997 = vld [vmem:[#allocation14 + $0x64] sm:$0xf]
        %v1998 = vld [vmem:[#allocation14 + $0x68] sm:$0xf]
        %v1999 = vld [vmem:[#allocation14 + $0x6c] sm:$0xf]
        %v2000 = vld [vmem:[#allocation14 + $0x70] sm:$0xf]
        %v2001 = vld [vmem:[#allocation14 + $0x74] sm:$0xf]
        %v2002 = vld [vmem:[#allocation14 + $0x78] sm:$0xf]
        %v2003 = vld [vmem:[#allocation14 + $0x7c] sm:$0xf]
        %v2004 = vld [vmem:[%s16] sm:$0x1]
        %v2006 = vlaneseq
        %v2007 = vshrl.u32 %v2006, 7
        %v2008 = vsub.s32 0, %v2007
        %v2009 = vrot.slane %v2004, %v2008
        %v2043 = vunpack.c.l.b16 %v1972
        %v2044 = vunpack.c.l.b16 %v1973
        %v2045 = vunpack.c.l.b16 %v1974
        %v2046 = vunpack.c.l.b16 %v1975
        %v2047 = vunpack.c.l.b16 %v1976
        %v2048 = vunpack.c.l.b16 %v1977
        %v2049 = vunpack.c.l.b16 %v1978
        %v2050 = vunpack.c.l.b16 %v1979
        %v2051 = vunpack.c.l.b16 %v1980
        %v2052 = vunpack.c.l.b16 %v1981
        %v2053 = vunpack.c.l.b16 %v1982
        %v2054 = vunpack.c.l.b16 %v1983
        %v2055 = vunpack.c.l.b16 %v1984
        %v2056 = vunpack.c.l.b16 %v1985
        %v2057 = vunpack.c.l.b16 %v1986
        %v2058 = vunpack.c.l.b16 %v1987
        %v2059 = vunpack.c.l.b16 %v1988
        %v2060 = vunpack.c.l.b16 %v1989
        %v2061 = vunpack.c.l.b16 %v1990
        %v2062 = vunpack.c.l.b16 %v1991
        %v2063 = vunpack.c.l.b16 %v1992
        %v2064 = vunpack.c.l.b16 %v1993
        %v2065 = vunpack.c.l.b16 %v1994
        %v2066 = vunpack.c.l.b16 %v1995
        %v2067 = vunpack.c.l.b16 %v1996
        %v2068 = vunpack.c.l.b16 %v1997
        %v2069 = vunpack.c.l.b16 %v1998
        %v2070 = vunpack.c.l.b16 %v1999
        %v2071 = vunpack.c.l.b16 %v2000
        %v2072 = vunpack.c.l.b16 %v2001
        %v2073 = vunpack.c.l.b16 %v2002
        %v2074 = vunpack.c.l.b16 %v2003
        %v2075 = vpack.c.b16 %v2044, %v2043
        %v2076 = vpack.c.b16 %v2046, %v2045
        %v2077 = vpack.c.b16 %v2048, %v2047
        %v2078 = vpack.c.b16 %v2050, %v2049
        %v2079 = vpack.c.b16 %v2052, %v2051
        %v2080 = vpack.c.b16 %v2054, %v2053
        %v2081 = vpack.c.b16 %v2056, %v2055
        %v2082 = vpack.c.b16 %v2058, %v2057
        %v2083 = vpack.c.b16 %v2060, %v2059
        %v2084 = vpack.c.b16 %v2062, %v2061
        %v2085 = vpack.c.b16 %v2064, %v2063
        %v2086 = vpack.c.b16 %v2066, %v2065
        %v2087 = vpack.c.b16 %v2068, %v2067
        %v2088 = vpack.c.b16 %v2070, %v2069
        %v2089 = vpack.c.b16 %v2072, %v2071
        %v2090 = vpack.c.b16 %v2074, %v2073
        %2107 = vmatprep.subr.bf16.mxu0 0
        %2108 = vmatpush1.bf16.msra.mxu0 %v2075
        %2109 = vmatprep.subr.bf16.mxu0 0
        %2110 = vmatpush1.bf16.msra.mxu0 %v2076
        %2111 = vmatprep.subr.bf16.mxu0 0
        %2112 = vmatpush1.bf16.msra.mxu0 %v2077
        %2113 = vmatprep.subr.bf16.mxu0 0
        %2114 = vmatpush1.bf16.msra.mxu0 %v2078
        %2115 = vmatprep.subr.bf16.mxu0 0
        %2116 = vmatpush1.bf16.msra.mxu0 %v2079
        %2117 = vmatprep.subr.bf16.mxu0 0
        %2118 = vmatpush1.bf16.msra.mxu0 %v2080
        %2119 = vmatprep.subr.bf16.mxu0 0
        %2120 = vmatpush1.bf16.msra.mxu0 %v2081
        %2121 = vmatprep.subr.bf16.mxu0 0
        %2122 = vmatpush1.bf16.msra.mxu0 %v2082
        %2123 = vmatprep.subr.bf16.mxu0 0
        %2124 = vmatpush1.bf16.msra.mxu0 %v2083
        %2125 = vmatprep.subr.bf16.mxu0 0
        %2126 = vmatpush1.bf16.msra.mxu0 %v2084
        %2127 = vmatprep.subr.bf16.mxu0 0
        %2128 = vmatpush1.bf16.msra.mxu0 %v2085
        %2129 = vmatprep.subr.bf16.mxu0 0
        %2130 = vmatpush1.bf16.msra.mxu0 %v2086
        %2131 = vmatprep.subr.bf16.mxu0 0
        %2132 = vmatpush1.bf16.msra.mxu0 %v2087
        %2133 = vmatprep.subr.bf16.mxu0 0
        %2134 = vmatpush1.bf16.msra.mxu0 %v2088
        %2135 = vmatprep.subr.bf16.mxu0 0
        %2136 = vmatpush1.bf16.msra.mxu0 %v2089
        %2137 = vmatprep.subr.bf16.mxu0 0
        %2138 = vmatpush1.bf16.msra.mxu0 %v2090
        %2139 = vmatprep.mubr.bf16.mxu0 %v1971
        %2140 = vmatmul.mubr.bf16.gmra.mrb[0].mxu0 %v1970
        %v2141 = vpop.f32.mrb[0].mxu0
        %v2142 = vadd.f32 %v2009, %v2141
        %v2143 = vpop.f32.mrb[0].mxu0
        %v2144 = vpop.f32.mrb[0].mxu0
        %v2145 = vadd.f32 %v2009, %v2144
        %v2146 = vpop.f32.mrb[0].mxu0
        %2147 = vdwg.mxu0
        %v2148 = vadd.f32 %v2142, %v1672
        %v2149 = vadd.f32 %v2145, %v1673
        %2150 = vst [vmem:[%s653] sm:$0xff] %v2148
        %2151 = vst [vmem:[%s653 + $0x8] sm:$0xff] %v2149
        %s2152 = sand.u32 %s407, 1
        %s2153 = scalar_lea.sflag [#allocation5], %s2152
        %s2154 = sand.u32 %s407, 1
        %s2155 = smul.addr %s2154, 16
        %s2156 = scalar_lea.vmem [#allocation15], %s2155
        // Predicated region
        $region117: #{tpu_custom_call.1} parent=87 // pred_check
          %p2157 = pneg %p417
        $region118: #{tpu_custom_call.1} parent=87 // pred_check_branch
          %2159 = sbr.rel (%p2157) target = $region120
        $region119: #{tpu_custom_call.1} parent=87 // pred_region
          %s2161 = ssub.s32 256, 256
          %2162 = vsyncadd %s2153, %s2161
          %s2163 = smul.addr %s37, 2
          %s2164 = smul.addr %s2163, 128
          %s2165 = scalar_lea.hbm %s17, %s2164
          %s2166 = sshll.u32 %s2156, 4
          %s2167 = int_to_ptr.vmem [resolvable:$true] %s2166
          %2172 = dma.vmem_to_hbm [thread:$0]  %s2167, 256, %s2165, %s2153, 128, 128, 8
        $region120: #{tpu_custom_call.1} parent=87 // pred_fallthru
          _
      $region88: #{tpu_custom_call.1} parent=5 // pred_fallthru
        _
      %p2173 = scmp.le.s32.totalorder 2, %s32
      // Predicated region
      $region121: #{tpu_custom_call.1} parent=5 // pred_check
        %p2174 = pneg %p2173
      $region122: #{tpu_custom_call.1} parent=5 // pred_check_branch
        %2176 = sbr.rel (%p2174) target = $region124
      $region123: #{tpu_custom_call.1} parent=5 // pred_region
        %s2177 = ssub.s32 %s32, 2
        // Predicated region
        $region125: #{tpu_custom_call.1} parent=123 // pred_check
          %p2178 = pneg %p423
        $region126: #{tpu_custom_call.1} parent=123 // pred_check_branch
          %2180 = sbr.rel (%p2178) target = $region128
        $region127: #{tpu_custom_call.1} parent=123 // pred_region
          %s2181 = sand.u32 %s408, 1
          %s2182 = scalar_lea.sflag [#allocation5], %s2181
          %s2183 = sand.u32 %s408, 1
          %s2184 = smul.addr %s2183, 16
          %s2185 = scalar_lea.vmem [#allocation15], %s2184
          %2186 = dma.done %s2182, 256
        $region128: #{tpu_custom_call.1} parent=123 // pred_fallthru
          _
      $region124: #{tpu_custom_call.1} parent=5 // pred_fallthru
        _
    $region6: #{tpu_custom_call.1} parent=1 // loop_footer
      %s36 = sadd.s32 1, %s32
    $region7: #{tpu_custom_call.1} parent=1 // loop_footer_branch
      %31 = sbr.rel target = $region3
    $region8: #{tpu_custom_call.1} parent=1 // loop_exit
      _
    %2187 = vsyncpa [#allocation4], 1
    %s2188 = scalar_lea.sflag [#allocation4], 1
    %2189 = vsyncpa %s2188, 1
    %2190 = vsyncpa [#allocation7], 1
    %2191 = vsyncpa [#allocation10], 1
    %2192 = vsyncpa [#allocation13], 1
    %2193 = vsyncpa [#allocation5], 1
    %s2194 = scalar_lea.sflag [#allocation5], 1
    %2195 = vsyncpa %s2194, 1

</llo_original>
